<compile_context>
chip_gen: v7x
topology: tpu7x:2x2x1
jax: 0.10.0
libtpu: 0.0.40
codegen_flags: <defaults>
</compile_context>

<pallas_src>
import jax
import jax.numpy as jnp
from jax.experimental import pallas as pl
from jax.experimental.pallas import tpu as pltpu


def mdfend_kernel(tile_dom_ref,              # scalar-prefetch (consumed by index_maps)
                  pooled_ref,                # (TB, H)  f32 (grouped + padded batch tile)
                  wt_ref, bt_ref,            # (H, D) wdt, (1, D) f32      text_feature_extractor
                  w1_ref, b1_ref,            # (1, D, D) wdt, (1, 1, D) f32  FFN_1 (per-domain)
                  w2_ref, b2_ref,            # (1, D, D) wdt, (1, 1, D) f32  FFN_2 (per-domain)
                  wg1_ref, bg1_ref,          # (1, D, D) wdt, (1, 1, D) f32  gate linear_1
                  wg2_ref, bg2_ref,          # (1, D, D) wdt, (1, 1, D) f32  gate linear_2
                  wgt_ref, wgd_ref, bg_ref,  # (1, 1, D), (1, 1, D), (1, 1, 1) f32  gate_linear split
                  out_ref):                  # (TB, D) f32
    wdt = wt_ref.dtype
    f32 = jnp.float32

    x = pooled_ref[...].astype(wdt)                                     # (TB, H)

    # text_feature_extractor: Linear(768->D) + ReLU (+ Dropout = identity)
    tf = jnp.maximum(
        jnp.dot(x, wt_ref[...], preferred_element_type=f32) + bt_ref[...], 0.0)   # (TB, D) f32
    tf_c = tf.astype(wdt)

    # DomainFeatureExtractor (weights of this tile's domain, chosen by index_map)
    h = jnp.maximum(
        jnp.dot(tf_c, w1_ref[0], preferred_element_type=f32) + b1_ref[0], 0.0)
    df = jnp.dot(h.astype(wdt), w2_ref[0], preferred_element_type=f32) + b2_ref[0]  # (TB, D) f32

    # AdaptiveGate
    t = jnp.maximum(
        jnp.dot(tf_c, wg1_ref[0], preferred_element_type=f32) + bg1_ref[0], 0.0)
    d = jnp.maximum(
        jnp.dot(df.astype(wdt), wg2_ref[0], preferred_element_type=f32) + bg2_ref[0], 0.0)
    # gate_linear(concat([t, d])) == sum(t * wg_top) + sum(d * wg_bot) + b.
    # VPU multiply + XLU lane reduction (no degenerate (D,1) MXU matmul).
    g = jax.nn.sigmoid(
        jnp.sum(t * wgt_ref[0], axis=-1, keepdims=True)
        + jnp.sum(d * wgd_ref[0], axis=-1, keepdims=True)
        + bg_ref[0])                                                     # (TB, 1)

    out_ref[...] = g * df + (1.0 - g) * tf


def mdfend_forward(pooled, domain_ids, params, *, tile_batch=128,
                   weight_dtype=jnp.float32):
    """pooled: [B, H] f32, domain_ids: [B] i32. Returns [B, D] f32."""
    B, H = pooled.shape
    D = params["wt"].shape[1]
    ND = params["w1"].shape[0]
    TB = int(tile_batch)
    assert TB % 8 == 0, "tile_batch must be a multiple of 8 (sublane dim)"

    # ---- cheap JAX pre-pass: group samples by domain, pad each group to TB ----
    onehot = domain_ids[:, None] == jnp.arange(ND, dtype=domain_ids.dtype)[None, :]
    counts = jnp.sum(onehot, axis=0)                                     # [ND]
    ranks = jnp.take_along_axis(
        jnp.cumsum(onehot.astype(jnp.int32), axis=0) - 1,
        domain_ids[:, None].astype(jnp.int32), axis=1)[:, 0]             # [B] rank within domain
    tiles_per_dom = (counts + TB - 1) // TB                              # [ND]
    tile_offsets = jnp.cumsum(tiles_per_dom) - tiles_per_dom             # [ND] first tile per domain

    n_tiles = B // TB + ND               # static upper bound on sum(tiles_per_dom)
    P = n_tiles * TB                     # padded (grouped) batch size

    dest = (tile_offsets[domain_ids] * TB + ranks).astype(jnp.int32)     # [B] scatter targets
    pooled_g = jnp.zeros((P, H), pooled.dtype).at[dest].set(pooled)

    # domain id of every (possibly padding-only) batch tile, scalar-prefetched.
    tile_dom = jnp.minimum(
        jnp.searchsorted(jnp.cumsum(tiles_per_dom), jnp.arange(n_tiles), side="right"),
        ND - 1).astype(jnp.int32)

    # Only the large matrices use the storage dtype (bf16 halves weight DMA);
    # biases / gate vectors stay f32 and accumulation stays f32.
    big = lambda name: params[name].astype(weight_dtype)

    # index_maps: (grid_i, tile_dom_smem_ref) -> block indices
    shared2 = lambda i, tdom: (0, 0)
    batch2 = lambda i, tdom: (i, 0)
    perdom3 = lambda i, tdom: (tdom[i], 0, 0)

    grid_spec = pltpu.PrefetchScalarGridSpec(
        num_scalar_prefetch=1,
        grid=(n_tiles,),
        in_specs=[
            pl.BlockSpec((TB, H), batch2),            # pooled (grouped + padded)
            pl.BlockSpec((H, D), shared2),            # wt  (constant block -> DMA'd once)
            pl.BlockSpec((1, D), shared2),            # bt
            pl.BlockSpec((1, D, D), perdom3),         # w1
            pl.BlockSpec((1, 1, D), perdom3),         # b1
            pl.BlockSpec((1, D, D), perdom3),         # w2
            pl.BlockSpec((1, 1, D), perdom3),         # b2
            pl.BlockSpec((1, D, D), perdom3),         # wg1
            pl.BlockSpec((1, 1, D), perdom3),         # bg1
            pl.BlockSpec((1, D, D), perdom3),         # wg2
            pl.BlockSpec((1, 1, D), perdom3),         # bg2
            pl.BlockSpec((1, 1, D), perdom3),         # wgate (text half)
            pl.BlockSpec((1, 1, D), perdom3),         # wgate (domain half)
            pl.BlockSpec((1, 1, 1), perdom3),         # bgate
        ],
        out_specs=pl.BlockSpec((TB, D), batch2),
    )

    out_g = pl.pallas_call(
        mdfend_kernel,
        out_shape=jax.ShapeDtypeStruct((P, D), jnp.float32),
        grid_spec=grid_spec,
        compiler_params=pltpu.CompilerParams(
            # batch-tile axis is independent -> shard across both TCs on v7x.
            dimension_semantics=("parallel",)),
        # NOTE: for production sizes (D=768, bigger TB) raise vmem_limit_bytes here.
    )(tile_dom, pooled_g,
      big("wt"), params["bt"],
      big("w1"), params["b1"], big("w2"), params["b2"],
      big("wg1"), params["bg1"], big("wg2"), params["bg2"],
      params["wgate_t"], params["wgate_d"], params["bgate"])

    return out_g[dest]                                   # gather back to original order


def mdfend_reference(pooled, domain_ids, params, weight_dtype=jnp.float32):
    """Plain-JAX reference mirroring the PyTorch forward (eval-mode dropout)."""
    f32 = jnp.float32
    cast = lambda w: w.astype(weight_dtype).astype(f32)
    tf = jnp.maximum(pooled @ cast(params["wt"]) + params["bt"], 0.0)    # [B, D]
    dom = domain_ids
    w1 = cast(params["w1"])[dom]; b1 = params["b1"][dom][:, 0]
    w2 = cast(params["w2"])[dom]; b2 = params["b2"][dom][:, 0]
    wg1 = cast(params["wg1"])[dom]; bg1 = params["bg1"][dom][:, 0]
    wg2 = cast(params["wg2"])[dom]; bg2 = params["bg2"][dom][:, 0]
    wgt = params["wgate_t"][dom][:, 0, :]; wgd = params["wgate_d"][dom][:, 0, :]
    bg = params["bgate"][dom][:, 0]
    h = jnp.maximum(jnp.einsum("bd,bde->be", tf, w1) + b1, 0.0)
    df = jnp.einsum("bd,bde->be", h, w2) + b2
    t = jnp.maximum(jnp.einsum("bd,bde->be", tf, wg1) + bg1, 0.0)
    d = jnp.maximum(jnp.einsum("bd,bde->be", df, wg2) + bg2, 0.0)
    g = jax.nn.sigmoid(jnp.sum(t * wgt, -1, keepdims=True)
                       + jnp.sum(d * wgd, -1, keepdims=True) + bg)
    return g * df + (1.0 - g) * tf


def init_params(key, bert_hidden, d_model, num_domains):
    ks = jax.random.split(key, 13)
    u = lambda k, shape, s=0.1: jax.random.uniform(k, shape, jnp.float32, -s, s)
    D, H, ND = d_model, bert_hidden, num_domains
    return {
        "wt": u(ks[0], (H, D)), "bt": u(ks[1], (1, D)),
        "w1": u(ks[2], (ND, D, D)), "b1": u(ks[3], (ND, 1, D)),
        "w2": u(ks[4], (ND, D, D)), "b2": u(ks[5], (ND, 1, D)),
        "wg1": u(ks[6], (ND, D, D)), "bg1": u(ks[7], (ND, 1, D)),
        "wg2": u(ks[8], (ND, D, D)), "bg2": u(ks[9], (ND, 1, D)),
        "wgate_t": u(ks[10], (ND, 1, D)), "wgate_d": u(ks[11], (ND, 1, D)),
        "bgate": u(ks[12], (ND, 1, 1)),
    }


if __name__ == "__main__":
    # Small stand-ins for (batch, bert_hidden=768, d_model=768, num_domains),
    # chosen lane/sublane-dense: H, D multiples of 128, TB multiple of 8.
    B, H, D, ND = 16, 256, 128, 3
    TB = 8
    key = jax.random.PRNGKey(0)
    k_p, k_d, k_w = jax.random.split(key, 3)

    pooled = jax.random.normal(k_p, (B, H), jnp.float32)          # BERT pooled_output
    domain_ids = jax.random.randint(k_d, (B,), 0, ND, jnp.int32)
    params = init_params(k_w, H, D, ND)

    # f32 weights: tight check.
    out = mdfend_forward(pooled, domain_ids, params, tile_batch=TB,
                         weight_dtype=jnp.float32)
    out = jax.block_until_ready(out)
    ref = mdfend_reference(pooled, domain_ids, params, jnp.float32)
    assert out.shape == (B, D)
    assert jnp.allclose(out, ref, atol=1e-4, rtol=1e-4), "f32 mismatch vs reference"

    # bf16 weight storage (halved weight DMA, f32 accumulation): looser check.
    out_bf = mdfend_forward(pooled, domain_ids, params, tile_batch=TB,
                            weight_dtype=jnp.bfloat16)
    out_bf = jax.block_until_ready(out_bf)
    ref_bf = mdfend_reference(pooled, domain_ids, params, jnp.bfloat16)
    assert jnp.allclose(out_bf, ref_bf, atol=5e-2, rtol=5e-2), "bf16 mismatch vs reference"

    print("KERNEL_OK")
</pallas_src>

<mosaic_0001>
module attributes {stable_mosaic.version = 11 : i64} {
  func.func @mdfend_kernel(%arg0: i32, %arg1: memref<5xi32, #tpu.memory_space<smem>>, %arg2: memref<8x256xf32, #tpu.memory_space<vmem>>, %arg3: memref<256x128xf32, #tpu.memory_space<vmem>>, %arg4: memref<1x128xf32, #tpu.memory_space<vmem>>, %arg5: memref<1x128x128xf32, #tpu.memory_space<vmem>>, %arg6: memref<1x1x128xf32, #tpu.memory_space<vmem>>, %arg7: memref<1x128x128xf32, #tpu.memory_space<vmem>>, %arg8: memref<1x1x128xf32, #tpu.memory_space<vmem>>, %arg9: memref<1x128x128xf32, #tpu.memory_space<vmem>>, %arg10: memref<1x1x128xf32, #tpu.memory_space<vmem>>, %arg11: memref<1x128x128xf32, #tpu.memory_space<vmem>>, %arg12: memref<1x1x128xf32, #tpu.memory_space<vmem>>, %arg13: memref<1x1x128xf32, #tpu.memory_space<vmem>>, %arg14: memref<1x1x128xf32, #tpu.memory_space<vmem>>, %arg15: memref<1x1x1xf32, #tpu.memory_space<vmem>>, %arg16: memref<8x128xf32, #tpu.memory_space<vmem>>) attributes {dimension_semantics = [#tpu.dimension_semantics<parallel>], iteration_bounds = array<i64: 5>, scalar_prefetch = 1 : i64, scratch_operands = 0 : i64, tpu.core_type = #tpu.core_type<tc>, window_params = [{transform_indices = @transform_0, window_bounds = array<i64: 8, 256>}, {pipeline_mode = #tpu.pipeline_mode<synchronous>, transform_indices = @transform_1, window_bounds = array<i64: 256, 128>}, {pipeline_mode = #tpu.pipeline_mode<synchronous>, transform_indices = @transform_2, window_bounds = array<i64: 1, 128>}, {transform_indices = @transform_3, window_bounds = array<i64: 1, 128, 128>}, {transform_indices = @transform_4, window_bounds = array<i64: 1, 1, 128>}, {transform_indices = @transform_5, window_bounds = array<i64: 1, 128, 128>}, {transform_indices = @transform_6, window_bounds = array<i64: 1, 1, 128>}, {transform_indices = @transform_7, window_bounds = array<i64: 1, 128, 128>}, {transform_indices = @transform_8, window_bounds = array<i64: 1, 1, 128>}, {transform_indices = @transform_9, window_bounds = array<i64: 1, 128, 128>}, {transform_indices = @transform_10, window_bounds = array<i64: 1, 1, 128>}, {transform_indices = @transform_11, window_bounds = array<i64: 1, 1, 128>}, {transform_indices = @transform_12, window_bounds = array<i64: 1, 1, 128>}, {transform_indices = @transform_13, window_bounds = array<i64: 1, 1, 1>}, {transform_indices = @transform_14, window_bounds = array<i64: 8, 128>}]} {
    %c0 = arith.constant 0 : index
    %c0_0 = arith.constant 0 : index
    %0 = vector.load %arg2[%c0, %c0_0] : memref<8x256xf32, #tpu.memory_space<vmem>>, vector<8x256xf32>
    %c0_1 = arith.constant 0 : index
    %c0_2 = arith.constant 0 : index
    %1 = vector.load %arg3[%c0_1, %c0_2] : memref<256x128xf32, #tpu.memory_space<vmem>>, vector<256x128xf32>
    %cst = arith.constant dense<0.000000e+00> : vector<8x128xf32>
    %2 = tpu.matmul %0, %1, %cst {dimension_numbers = #tpu.dot_dimension_numbers<[1], [0], [0], [1], [0, 0, 1, 1], [], []>} : vector<8x256xf32>, vector<256x128xf32>, vector<8x128xf32> -> vector<8x128xf32>
    %c0_3 = arith.constant 0 : index
    %c0_4 = arith.constant 0 : index
    %3 = vector.load %arg4[%c0_3, %c0_4] : memref<1x128xf32, #tpu.memory_space<vmem>>, vector<1x128xf32>
    %4 = vector.broadcast %3 : vector<1x128xf32> to vector<8x128xf32>
    %5 = arith.addf %2, %4 : vector<8x128xf32>
    %cst_5 = arith.constant 0.000000e+00 : f32
    %6 = vector.broadcast %cst_5 : f32 to vector<8x128xf32>
    %7 = arith.maximumf %5, %6 : vector<8x128xf32>
    %c0_6 = arith.constant 0 : index
    %c0_7 = arith.constant 0 : index
    %c0_8 = arith.constant 0 : index
    %8 = vector.load %arg5[%c0_6, %c0_7, %c0_8] : memref<1x128x128xf32, #tpu.memory_space<vmem>>, vector<1x128x128xf32>
    %9 = vector.shape_cast %8 : vector<1x128x128xf32> to vector<128x128xf32>
    %cst_9 = arith.constant dense<0.000000e+00> : vector<8x128xf32>
    %10 = tpu.matmul %7, %9, %cst_9 {dimension_numbers = #tpu.dot_dimension_numbers<[1], [0], [0], [1], [0, 0, 1, 1], [], []>} : vector<8x128xf32>, vector<128x128xf32>, vector<8x128xf32> -> vector<8x128xf32>
    %c0_10 = arith.constant 0 : index
    %c0_11 = arith.constant 0 : index
    %c0_12 = arith.constant 0 : index
    %11 = vector.load %arg6[%c0_10, %c0_11, %c0_12] : memref<1x1x128xf32, #tpu.memory_space<vmem>>, vector<1x1x128xf32>
    %12 = vector.shape_cast %11 : vector<1x1x128xf32> to vector<1x128xf32>
    %13 = vector.broadcast %12 : vector<1x128xf32> to vector<8x128xf32>
    %14 = arith.addf %10, %13 : vector<8x128xf32>
    %cst_13 = arith.constant 0.000000e+00 : f32
    %15 = vector.broadcast %cst_13 : f32 to vector<8x128xf32>
    %16 = arith.maximumf %14, %15 : vector<8x128xf32>
    %c0_14 = arith.constant 0 : index
    %c0_15 = arith.constant 0 : index
    %c0_16 = arith.constant 0 : index
    %17 = vector.load %arg7[%c0_14, %c0_15, %c0_16] : memref<1x128x128xf32, #tpu.memory_space<vmem>>, vector<1x128x128xf32>
    %18 = vector.shape_cast %17 : vector<1x128x128xf32> to vector<128x128xf32>
    %cst_17 = arith.constant dense<0.000000e+00> : vector<8x128xf32>
    %19 = tpu.matmul %16, %18, %cst_17 {dimension_numbers = #tpu.dot_dimension_numbers<[1], [0], [0], [1], [0, 0, 1, 1], [], []>} : vector<8x128xf32>, vector<128x128xf32>, vector<8x128xf32> -> vector<8x128xf32>
    %c0_18 = arith.constant 0 : index
    %c0_19 = arith.constant 0 : index
    %c0_20 = arith.constant 0 : index
    %20 = vector.load %arg8[%c0_18, %c0_19, %c0_20] : memref<1x1x128xf32, #tpu.memory_space<vmem>>, vector<1x1x128xf32>
    %21 = vector.shape_cast %20 : vector<1x1x128xf32> to vector<1x128xf32>
    %22 = vector.broadcast %21 : vector<1x128xf32> to vector<8x128xf32>
    %23 = arith.addf %19, %22 : vector<8x128xf32>
    %c0_21 = arith.constant 0 : index
    %c0_22 = arith.constant 0 : index
    %c0_23 = arith.constant 0 : index
    %24 = vector.load %arg9[%c0_21, %c0_22, %c0_23] : memref<1x128x128xf32, #tpu.memory_space<vmem>>, vector<1x128x128xf32>
    %25 = vector.shape_cast %24 : vector<1x128x128xf32> to vector<128x128xf32>
    %cst_24 = arith.constant dense<0.000000e+00> : vector<8x128xf32>
    %26 = tpu.matmul %7, %25, %cst_24 {dimension_numbers = #tpu.dot_dimension_numbers<[1], [0], [0], [1], [0, 0, 1, 1], [], []>} : vector<8x128xf32>, vector<128x128xf32>, vector<8x128xf32> -> vector<8x128xf32>
    %c0_25 = arith.constant 0 : index
    %c0_26 = arith.constant 0 : index
    %c0_27 = arith.constant 0 : index
    %27 = vector.load %arg10[%c0_25, %c0_26, %c0_27] : memref<1x1x128xf32, #tpu.memory_space<vmem>>, vector<1x1x128xf32>
    %28 = vector.shape_cast %27 : vector<1x1x128xf32> to vector<1x128xf32>
    %29 = vector.broadcast %28 : vector<1x128xf32> to vector<8x128xf32>
    %30 = arith.addf %26, %29 : vector<8x128xf32>
    %cst_28 = arith.constant 0.000000e+00 : f32
    %31 = vector.broadcast %cst_28 : f32 to vector<8x128xf32>
    %32 = arith.maximumf %30, %31 : vector<8x128xf32>
    %c0_29 = arith.constant 0 : index
    %c0_30 = arith.constant 0 : index
    %c0_31 = arith.constant 0 : index
    %33 = vector.load %arg11[%c0_29, %c0_30, %c0_31] : memref<1x128x128xf32, #tpu.memory_space<vmem>>, vector<1x128x128xf32>
    %34 = vector.shape_cast %33 : vector<1x128x128xf32> to vector<128x128xf32>
    %cst_32 = arith.constant dense<0.000000e+00> : vector<8x128xf32>
    %35 = tpu.matmul %23, %34, %cst_32 {dimension_numbers = #tpu.dot_dimension_numbers<[1], [0], [0], [1], [0, 0, 1, 1], [], []>} : vector<8x128xf32>, vector<128x128xf32>, vector<8x128xf32> -> vector<8x128xf32>
    %c0_33 = arith.constant 0 : index
    %c0_34 = arith.constant 0 : index
    %c0_35 = arith.constant 0 : index
    %36 = vector.load %arg12[%c0_33, %c0_34, %c0_35] : memref<1x1x128xf32, #tpu.memory_space<vmem>>, vector<1x1x128xf32>
    %37 = vector.shape_cast %36 : vector<1x1x128xf32> to vector<1x128xf32>
    %38 = vector.broadcast %37 : vector<1x128xf32> to vector<8x128xf32>
    %39 = arith.addf %35, %38 : vector<8x128xf32>
    %cst_36 = arith.constant 0.000000e+00 : f32
    %40 = vector.broadcast %cst_36 : f32 to vector<8x128xf32>
    %41 = arith.maximumf %39, %40 : vector<8x128xf32>
    %c0_37 = arith.constant 0 : index
    %c0_38 = arith.constant 0 : index
    %c0_39 = arith.constant 0 : index
    %42 = vector.load %arg13[%c0_37, %c0_38, %c0_39] : memref<1x1x128xf32, #tpu.memory_space<vmem>>, vector<1x1x128xf32>
    %43 = vector.shape_cast %42 : vector<1x1x128xf32> to vector<1x128xf32>
    %44 = vector.broadcast %43 : vector<1x128xf32> to vector<8x128xf32>
    %45 = arith.mulf %32, %44 : vector<8x128xf32>
    %cst_40 = arith.constant dense<0.000000e+00> : vector<8xf32>
    %46 = vector.multi_reduction <add>, %45, %cst_40 [1] : vector<8x128xf32> to vector<8xf32>
    %47 = vector.shape_cast %46 : vector<8xf32> to vector<8x1xf32>
    %c0_41 = arith.constant 0 : index
    %c0_42 = arith.constant 0 : index
    %c0_43 = arith.constant 0 : index
    %48 = vector.load %arg14[%c0_41, %c0_42, %c0_43] : memref<1x1x128xf32, #tpu.memory_space<vmem>>, vector<1x1x128xf32>
    %49 = vector.shape_cast %48 : vector<1x1x128xf32> to vector<1x128xf32>
    %50 = vector.broadcast %49 : vector<1x128xf32> to vector<8x128xf32>
    %51 = arith.mulf %41, %50 : vector<8x128xf32>
    %cst_44 = arith.constant dense<0.000000e+00> : vector<8xf32>
    %52 = vector.multi_reduction <add>, %51, %cst_44 [1] : vector<8x128xf32> to vector<8xf32>
    %53 = vector.shape_cast %52 : vector<8xf32> to vector<8x1xf32>
    %54 = arith.addf %47, %53 : vector<8x1xf32>
    %c0_45 = arith.constant 0 : index
    %c0_46 = arith.constant 0 : index
    %c0_47 = arith.constant 0 : index
    %55 = vector.load %arg15[%c0_45, %c0_46, %c0_47] : memref<1x1x1xf32, #tpu.memory_space<vmem>>, vector<1x1x1xf32>
    %56 = vector.shape_cast %55 : vector<1x1x1xf32> to vector<1x1xf32>
    %57 = vector.broadcast %56 : vector<1x1xf32> to vector<8x1xf32>
    %58 = arith.addf %54, %57 : vector<8x1xf32>
    %59 = arith.negf %58 : vector<8x1xf32>
    %60 = math.exp %59 : vector<8x1xf32>
    %cst_48 = arith.constant 1.000000e+00 : f32
    %61 = vector.broadcast %cst_48 : f32 to vector<8x1xf32>
    %62 = arith.addf %61, %60 : vector<8x1xf32>
    %63 = arith.divf %61, %62 : vector<8x1xf32>
    %64 = vector.broadcast %63 : vector<8x1xf32> to vector<8x128xf32>
    %65 = arith.mulf %64, %23 : vector<8x128xf32>
    %cst_49 = arith.constant 1.000000e+00 : f32
    %66 = vector.broadcast %cst_49 : f32 to vector<8x1xf32>
    %67 = arith.subf %66, %63 : vector<8x1xf32>
    %68 = vector.broadcast %67 : vector<8x1xf32> to vector<8x128xf32>
    %69 = arith.mulf %68, %7 : vector<8x128xf32>
    %70 = arith.addf %65, %69 : vector<8x128xf32>
    %c0_50 = arith.constant 0 : index
    %c0_51 = arith.constant 0 : index
    %71 = vector.load %arg16[%c0_50, %c0_51] : memref<8x128xf32, #tpu.memory_space<vmem>>, vector<8x128xf32>
    tpu.vector_store %arg16[%c0_50, %c0_51], %70 {strides = array<i32>} : memref<8x128xf32, #tpu.memory_space<vmem>>, vector<8x128xf32>,
    return
  }
  func.func @transform_0(%arg0: i32, %arg1: memref<5xi32, #tpu.memory_space<smem>>) -> (i32, i32) {
    %c0_i32 = arith.constant 0 : i32
    %c0_i32_0 = arith.constant 0 : i32
    return %arg0, %c0_i32 : i32, i32
  }
  func.func @transform_1(%arg0: i32, %arg1: memref<5xi32, #tpu.memory_space<smem>>) -> (i32, i32) {
    %c0_i32 = arith.constant 0 : i32
    %c0_i32_0 = arith.constant 0 : i32
    %c0_i32_1 = arith.constant 0 : i32
    return %c0_i32, %c0_i32_0 : i32, i32
  }
  func.func @transform_2(%arg0: i32, %arg1: memref<5xi32, #tpu.memory_space<smem>>) -> (i32, i32) {
    %c0_i32 = arith.constant 0 : i32
    %c0_i32_0 = arith.constant 0 : i32
    %c0_i32_1 = arith.constant 0 : i32
    return %c0_i32, %c0_i32_0 : i32, i32
  }
  func.func @transform_3(%arg0: i32, %arg1: memref<5xi32, #tpu.memory_space<smem>>) -> (i32, i32, i32) {
    %0 = arith.index_cast %arg0 : i32 to index
    %1 = memref.load %arg1[%0] : memref<5xi32, #tpu.memory_space<smem>>
    %c0_i32 = arith.constant 0 : i32
    %c0_i32_0 = arith.constant 0 : i32
    %c0_i32_1 = arith.constant 0 : i32
    return %1, %c0_i32, %c0_i32_0 : i32, i32, i32
  }
  func.func @transform_4(%arg0: i32, %arg1: memref<5xi32, #tpu.memory_space<smem>>) -> (i32, i32, i32) {
    %0 = arith.index_cast %arg0 : i32 to index
    %1 = memref.load %arg1[%0] : memref<5xi32, #tpu.memory_space<smem>>
    %c0_i32 = arith.constant 0 : i32
    %c0_i32_0 = arith.constant 0 : i32
    %c0_i32_1 = arith.constant 0 : i32
    return %1, %c0_i32, %c0_i32_0 : i32, i32, i32
  }
  func.func @transform_5(%arg0: i32, %arg1: memref<5xi32, #tpu.memory_space<smem>>) -> (i32, i32, i32) {
    %0 = arith.index_cast %arg0 : i32 to index
    %1 = memref.load %arg1[%0] : memref<5xi32, #tpu.memory_space<smem>>
    %c0_i32 = arith.constant 0 : i32
    %c0_i32_0 = arith.constant 0 : i32
    %c0_i32_1 = arith.constant 0 : i32
    return %1, %c0_i32, %c0_i32_0 : i32, i32, i32
  }
  func.func @transform_6(%arg0: i32, %arg1: memref<5xi32, #tpu.memory_space<smem>>) -> (i32, i32, i32) {
    %0 = arith.index_cast %arg0 : i32 to index
    %1 = memref.load %arg1[%0] : memref<5xi32, #tpu.memory_space<smem>>
    %c0_i32 = arith.constant 0 : i32
    %c0_i32_0 = arith.constant 0 : i32
    %c0_i32_1 = arith.constant 0 : i32
    return %1, %c0_i32, %c0_i32_0 : i32, i32, i32
  }
  func.func @transform_7(%arg0: i32, %arg1: memref<5xi32, #tpu.memory_space<smem>>) -> (i32, i32, i32) {
    %0 = arith.index_cast %arg0 : i32 to index
    %1 = memref.load %arg1[%0] : memref<5xi32, #tpu.memory_space<smem>>
    %c0_i32 = arith.constant 0 : i32
    %c0_i32_0 = arith.constant 0 : i32
    %c0_i32_1 = arith.constant 0 : i32
    return %1, %c0_i32, %c0_i32_0 : i32, i32, i32
  }
  func.func @transform_8(%arg0: i32, %arg1: memref<5xi32, #tpu.memory_space<smem>>) -> (i32, i32, i32) {
    %0 = arith.index_cast %arg0 : i32 to index
    %1 = memref.load %arg1[%0] : memref<5xi32, #tpu.memory_space<smem>>
    %c0_i32 = arith.constant 0 : i32
    %c0_i32_0 = arith.constant 0 : i32
    %c0_i32_1 = arith.constant 0 : i32
    return %1, %c0_i32, %c0_i32_0 : i32, i32, i32
  }
  func.func @transform_9(%arg0: i32, %arg1: memref<5xi32, #tpu.memory_space<smem>>) -> (i32, i32, i32) {
    %0 = arith.index_cast %arg0 : i32 to index
    %1 = memref.load %arg1[%0] : memref<5xi32, #tpu.memory_space<smem>>
    %c0_i32 = arith.constant 0 : i32
    %c0_i32_0 = arith.constant 0 : i32
    %c0_i32_1 = arith.constant 0 : i32
    return %1, %c0_i32, %c0_i32_0 : i32, i32, i32
  }
  func.func @transform_10(%arg0: i32, %arg1: memref<5xi32, #tpu.memory_space<smem>>) -> (i32, i32, i32) {
    %0 = arith.index_cast %arg0 : i32 to index
    %1 = memref.load %arg1[%0] : memref<5xi32, #tpu.memory_space<smem>>
    %c0_i32 = arith.constant 0 : i32
    %c0_i32_0 = arith.constant 0 : i32
    %c0_i32_1 = arith.constant 0 : i32
    return %1, %c0_i32, %c0_i32_0 : i32, i32, i32
  }
  func.func @transform_11(%arg0: i32, %arg1: memref<5xi32, #tpu.memory_space<smem>>) -> (i32, i32, i32) {
    %0 = arith.index_cast %arg0 : i32 to index
    %1 = memref.load %arg1[%0] : memref<5xi32, #tpu.memory_space<smem>>
    %c0_i32 = arith.constant 0 : i32
    %c0_i32_0 = arith.constant 0 : i32
    %c0_i32_1 = arith.constant 0 : i32
    return %1, %c0_i32, %c0_i32_0 : i32, i32, i32
  }
  func.func @transform_12(%arg0: i32, %arg1: memref<5xi32, #tpu.memory_space<smem>>) -> (i32, i32, i32) {
    %0 = arith.index_cast %arg0 : i32 to index
    %1 = memref.load %arg1[%0] : memref<5xi32, #tpu.memory_space<smem>>
    %c0_i32 = arith.constant 0 : i32
    %c0_i32_0 = arith.constant 0 : i32
    %c0_i32_1 = arith.constant 0 : i32
    return %1, %c0_i32, %c0_i32_0 : i32, i32, i32
  }
  func.func @transform_13(%arg0: i32, %arg1: memref<5xi32, #tpu.memory_space<smem>>) -> (i32, i32, i32) {
    %0 = arith.index_cast %arg0 : i32 to index
    %1 = memref.load %arg1[%0] : memref<5xi32, #tpu.memory_space<smem>>
    %c0_i32 = arith.constant 0 : i32
    %c0_i32_0 = arith.constant 0 : i32
    %c0_i32_1 = arith.constant 0 : i32
    return %1, %c0_i32, %c0_i32_0 : i32, i32, i32
  }
  func.func @transform_14(%arg0: i32, %arg1: memref<5xi32, #tpu.memory_space<smem>>) -> (i32, i32) {
    %c0_i32 = arith.constant 0 : i32
    %c0_i32_0 = arith.constant 0 : i32
    return %arg0, %c0_i32 : i32, i32
  }
}

</mosaic_0001>

<llo_original>
// kernel: tpu_custom_call.1
$region0: #{tpu_custom_call.1}
  #allocation0 [shape = 'u32[]', space=smem, size = 0x4, offset = 0x4, fixed_abs, tag = 'smem constant byte address 0x4 - core index']
  #allocation1 [shape = 'u32[144,128]{1,0:T(1,128)}', space=vmem, size = 0x12000, scoped, tag = 'internal scratch']
  #allocation2 [shape = 's32[1]{0}', space=sflag, size = 0x4, scoped, tag = 'scoped memory for tpu_custom_call.1']
  #allocation3 [shape = 'u8[512]{0}', space=smem, size = 0x200, scoped, tag = 'prefetched SMEM operand 0']
  %s0 = inlined_call_operand.hbm [shape: s32[5], index: 0, kind: input, shape index: {}]
  %s1 = inlined_call_operand.hbm [shape: f32[40,256], index: 1, kind: input, shape index: {}]
  %s2 = inlined_call_operand.hbm [shape: f32[256,128], index: 2, kind: input, shape index: {}]
  %s3 = inlined_call_operand.hbm [shape: f32[1,128], index: 3, kind: input, shape index: {}]
  %s4 = inlined_call_operand.hbm [shape: f32[3,128,128], index: 4, kind: input, shape index: {}]
  %s5 = inlined_call_operand.vmem [shape: f32[3,1,128], index: 5, kind: input, shape index: {}]
  %s6 = inlined_call_operand.hbm [shape: f32[3,128,128], index: 6, kind: input, shape index: {}]
  %s7 = inlined_call_operand.vmem [shape: f32[3,1,128], index: 7, kind: input, shape index: {}]
  %s8 = inlined_call_operand.hbm [shape: f32[3,128,128], index: 8, kind: input, shape index: {}]
  %s9 = inlined_call_operand.vmem [shape: f32[3,1,128], index: 9, kind: input, shape index: {}]
  %s10 = inlined_call_operand.hbm [shape: f32[3,128,128], index: 10, kind: input, shape index: {}]
  %s11 = inlined_call_operand.vmem [shape: f32[3,1,128], index: 11, kind: input, shape index: {}]
  %s12 = inlined_call_operand.vmem [shape: f32[3,1,128], index: 12, kind: input, shape index: {}]
  %s13 = inlined_call_operand.vmem [shape: f32[3,1,128], index: 13, kind: input, shape index: {}]
  %s14 = inlined_call_operand.vmem [shape: f32[3,1,1], index: 14, kind: input, shape index: {}]
  %s15 = inlined_call_operand.hbm [shape: f32[40,128], index: 15, kind: output, shape index: {}]
  %s16 = sld [smem:[#allocation0]]
  $region117: #{tpu_custom_call.1} parent=0
    _
  %s18 = ssub.s32 1, %s16
  %s19 = scalar_select 0, %s18, %s16
  %21 = dma.hbm_to_smem %s0, 16, [#allocation3], [#allocation2]
  %22 = dma.done [#allocation2], 16
  %23 = sfence
  $region1: #{tpu_custom_call.1} parent=0
    #allocation4 [shape = 'u8[16384]{0}', space=vmem, size = 0x4000, scoped, tag = 'input window, operand 1']
    #allocation5 [shape = 's32[2]{0}', space=sflag, size = 0x8, scoped, tag = 'scoped memory for tpu_custom_call.1']
    #allocation6 [shape = 's32[2]{0}', space=sflag, size = 0x8, scoped, tag = 'scoped memory for tpu_custom_call.1']
    #allocation7 [shape = 'u8[131072]{0}', space=vmem, size = 0x20000, scoped, tag = 'input window, operand 2, single buffered']
    #allocation8 [shape = 's32[1]{0}', space=sflag, size = 0x4, scoped, tag = 'scoped memory for tpu_custom_call.1']
    #allocation9 [shape = 'u8[512]{0}', space=vmem, size = 0x400, scoped, tag = 'input window, operand 3, single buffered']
    #allocation10 [shape = 'u8[131072]{0}', space=vmem, size = 0x20000, scoped, tag = 'input window, operand 4']
    #allocation11 [shape = 's32[2]{0}', space=sflag, size = 0x8, scoped, tag = 'scoped memory for tpu_custom_call.1']
    #allocation12 [shape = 'u8[131072]{0}', space=vmem, size = 0x20000, scoped, tag = 'input window, operand 6']
    #allocation13 [shape = 'u8[131072]{0}', space=vmem, size = 0x20000, scoped, tag = 'input window, operand 8']
    #allocation14 [shape = 's32[2]{0}', space=sflag, size = 0x8, scoped, tag = 'scoped memory for tpu_custom_call.1']
    #allocation15 [shape = 'u8[131072]{0}', space=vmem, size = 0x20000, scoped, tag = 'input window, operand 10']
    #allocation16 [shape = 'u8[8192]{0}', space=vmem, size = 0x2000, scoped, tag = 'output window, operand 0']
    %24 = vsyncpa [#allocation5], 0
    %s25 = scalar_lea.sflag [#allocation5], 1
    %26 = vsyncpa %s25, 0
    %27 = vsyncpa [#allocation8], 0
    %28 = vsyncpa [#allocation11], 0
    %s29 = scalar_lea.sflag [#allocation11], 1
    %30 = vsyncpa %s29, 0
    %31 = vsyncpa [#allocation14], 0
    %s32 = scalar_lea.sflag [#allocation14], 1
    %33 = vsyncpa %s32, 0
    %34 = vsyncpa [#allocation6], 0
    %s35 = scalar_lea.sflag [#allocation6], 1
    %36 = vsyncpa %s35, 0
    loop: start=0, step=1, limit=7
    $region2: #{tpu_custom_call.1} parent=1 // loop_pre_header
      _
    $region3: #{tpu_custom_call.1} parent=1 // loop_header
      %s38 = sphi 0, %s42
      %p39 = scmp.ge.s32.totalorder %s38, 7
      %s48 = sphi 0, %s50
      %s51 = sphi 0, %s48
      %s52 = sphi 0, %s51
      %s68 = sphi 0, %s52
      %s72 = sphi 0, %s72
      %s74 = sphi 0, %s72
      %s75 = sphi 0, %s74
      %s89 = sphi 0, %s75
      %s93 = sphi 0, %s93
      %s95 = sphi 0, %s93
      %s96 = sphi 0, %s95
      %s110 = sphi 0, %s96
      %s118 = sphi 0, %s120
      %s121 = sphi 0, %s118
      %s122 = sphi 0, %s121
      %s138 = sphi 0, %s122
      %s146 = sphi 0, %s148
      %s149 = sphi 0, %s146
      %s150 = sphi 0, %s149
      %s166 = sphi 0, %s150
      %s174 = sphi 0, %s176
      %s177 = sphi 0, %s174
      %s178 = sphi 0, %s177
      %s194 = sphi 0, %s178
      %s202 = sphi 0, %s204
      %s205 = sphi 0, %s202
      %s206 = sphi 0, %s205
      %s222 = sphi 0, %s206
      %s230 = sphi 0, %s232
      %s233 = sphi 0, %s230
      %s234 = sphi 0, %s233
      %s250 = sphi 0, %s234
      %s258 = sphi 0, %s260
      %s261 = sphi 0, %s258
      %s262 = sphi 0, %s261
      %s278 = sphi 0, %s262
      %s286 = sphi 0, %s288
      %s289 = sphi 0, %s286
      %s290 = sphi 0, %s289
      %s306 = sphi 0, %s290
      %s314 = sphi 0, %s316
      %s317 = sphi 0, %s314
      %s318 = sphi 0, %s317
      %s334 = sphi 0, %s318
      %s342 = sphi 0, %s344
      %s345 = sphi 0, %s342
      %s346 = sphi 0, %s345
      %s362 = sphi 0, %s346
      %s370 = sphi 0, %s372
      %s373 = sphi 0, %s370
      %s374 = sphi 0, %s373
      %s390 = sphi 0, %s374
      %s398 = sphi 0, %s400
      %s401 = sphi 0, %s398
      %s402 = sphi 0, %s401
      %s418 = sphi 0, %s402
      %s424 = sphi 0, %s426
      %s427 = sphi 0, %s424
      %s428 = sphi 0, %s427
      %s444 = sphi 0, %s428
    $region4: #{tpu_custom_call.1} parent=1 // loop_header_branch
      %41 = sbr.rel (%p39) target = $region8
    $region5: #{tpu_custom_call.1} parent=1 // loop_body
      %s43 = ssub.s32 %s38, 1
      %s44 = ssub.s32 %s38, 2
      %s45 = sadd.s32 %s38, 1
      %s46 = ssub.s32 %s38, %s45
      %p47 = scmp.eq.s32.totalorder %s46, 0
      %s49 = sadd.s32 %s48, 1
      %s50 = scalar_select %p47, %s48, %s49
      %p53 = pneg %p47
      %p54 = scmp.eq.s32.totalorder %s38, 4
      %p55 = por %p53, %p54
      %p56 = scmp.ne.s32.totalorder %s48, %s51
      %p57 = scmp.eq.s32.totalorder %s38, 0
      %p58 = por %p56, %p57
      %p59 = scmp.ne.s32.totalorder %s48, %s51
      %p60 = scmp.eq.s32.totalorder %s43, 4
      %p61 = por %p59, %p60
      %p62 = scmp.ne.s32.totalorder %s51, %s52
      %p63 = scmp.eq.s32.totalorder %s43, 0
      %p64 = por %p62, %p63
      %p65 = scmp.ne.s32.totalorder %s51, %s52
      %p66 = scmp.eq.s32.totalorder %s44, 4
      %p67 = por %p65, %p66
      %p69 = scmp.ne.s32.totalorder %s52, %s68
      %p70 = scmp.eq.s32.totalorder %s44, 0
      %p71 = por %p69, %p70
      %s73 = sadd.s32 %s72, 1
      %p76 = scmp.eq.s32.totalorder %s38, 4
      %p77 = scmp.ne.s32.totalorder %s72, %s74
      %p78 = scmp.eq.s32.totalorder %s38, 0
      %p79 = por %p77, %p78
      %p80 = scmp.ne.s32.totalorder %s72, %s74
      %p81 = scmp.eq.s32.totalorder %s43, 4
      %p82 = por %p80, %p81
      %p83 = scmp.ne.s32.totalorder %s74, %s75
      %p84 = scmp.eq.s32.totalorder %s43, 0
      %p85 = por %p83, %p84
      %p86 = scmp.ne.s32.totalorder %s74, %s75
      %p87 = scmp.eq.s32.totalorder %s44, 4
      %p88 = por %p86, %p87
      %p90 = scmp.ne.s32.totalorder %s75, %s89
      %p91 = scmp.eq.s32.totalorder %s44, 0
      %p92 = por %p90, %p91
      %s94 = sadd.s32 %s93, 1
      %p97 = scmp.eq.s32.totalorder %s38, 4
      %p98 = scmp.ne.s32.totalorder %s93, %s95
      %p99 = scmp.eq.s32.totalorder %s38, 0
      %p100 = por %p98, %p99
      %p101 = scmp.ne.s32.totalorder %s93, %s95
      %p102 = scmp.eq.s32.totalorder %s43, 4
      %p103 = por %p101, %p102
      %p104 = scmp.ne.s32.totalorder %s95, %s96
      %p105 = scmp.eq.s32.totalorder %s43, 0
      %p106 = por %p104, %p105
      %p107 = scmp.ne.s32.totalorder %s95, %s96
      %p108 = scmp.eq.s32.totalorder %s44, 4
      %p109 = por %p107, %p108
      %p111 = scmp.ne.s32.totalorder %s96, %s110
      %p112 = scmp.eq.s32.totalorder %s44, 0
      %p113 = por %p111, %p112
      %s114 = sld [smem:[#allocation3 + %s38]]
      %s115 = sld [smem:[#allocation3 + %s45]]
      %s116 = ssub.s32 %s114, %s115
      %p117 = scmp.eq.s32.totalorder %s116, 0
      %s119 = sadd.s32 %s118, 1
      %s120 = scalar_select %p117, %s118, %s119
      %p123 = pneg %p117
      %p124 = scmp.eq.s32.totalorder %s38, 4
      %p125 = por %p123, %p124
      %p126 = scmp.ne.s32.totalorder %s118, %s121
      %p127 = scmp.eq.s32.totalorder %s38, 0
      %p128 = por %p126, %p127
      %p129 = scmp.ne.s32.totalorder %s118, %s121
      %p130 = scmp.eq.s32.totalorder %s43, 4
      %p131 = por %p129, %p130
      %p132 = scmp.ne.s32.totalorder %s121, %s122
      %p133 = scmp.eq.s32.totalorder %s43, 0
      %p134 = por %p132, %p133
      %p135 = scmp.ne.s32.totalorder %s121, %s122
      %p136 = scmp.eq.s32.totalorder %s44, 4
      %p137 = por %p135, %p136
      %p139 = scmp.ne.s32.totalorder %s122, %s138
      %p140 = scmp.eq.s32.totalorder %s44, 0
      %p141 = por %p139, %p140
      %s142 = sld [smem:[#allocation3 + %s38]]
      %s143 = sld [smem:[#allocation3 + %s45]]
      %s144 = ssub.s32 %s142, %s143
      %p145 = scmp.eq.s32.totalorder %s144, 0
      %s147 = sadd.s32 %s146, 1
      %s148 = scalar_select %p145, %s146, %s147
      %p151 = pneg %p145
      %p152 = scmp.eq.s32.totalorder %s38, 4
      %p153 = por %p151, %p152
      %p154 = scmp.ne.s32.totalorder %s146, %s149
      %p155 = scmp.eq.s32.totalorder %s38, 0
      %p156 = por %p154, %p155
      %p157 = scmp.ne.s32.totalorder %s146, %s149
      %p158 = scmp.eq.s32.totalorder %s43, 4
      %p159 = por %p157, %p158
      %p160 = scmp.ne.s32.totalorder %s149, %s150
      %p161 = scmp.eq.s32.totalorder %s43, 0
      %p162 = por %p160, %p161
      %p163 = scmp.ne.s32.totalorder %s149, %s150
      %p164 = scmp.eq.s32.totalorder %s44, 4
      %p165 = por %p163, %p164
      %p167 = scmp.ne.s32.totalorder %s150, %s166
      %p168 = scmp.eq.s32.totalorder %s44, 0
      %p169 = por %p167, %p168
      %s170 = sld [smem:[#allocation3 + %s38]]
      %s171 = sld [smem:[#allocation3 + %s45]]
      %s172 = ssub.s32 %s170, %s171
      %p173 = scmp.eq.s32.totalorder %s172, 0
      %s175 = sadd.s32 %s174, 1
      %s176 = scalar_select %p173, %s174, %s175
      %p179 = pneg %p173
      %p180 = scmp.eq.s32.totalorder %s38, 4
      %p181 = por %p179, %p180
      %p182 = scmp.ne.s32.totalorder %s174, %s177
      %p183 = scmp.eq.s32.totalorder %s38, 0
      %p184 = por %p182, %p183
      %p185 = scmp.ne.s32.totalorder %s174, %s177
      %p186 = scmp.eq.s32.totalorder %s43, 4
      %p187 = por %p185, %p186
      %p188 = scmp.ne.s32.totalorder %s177, %s178
      %p189 = scmp.eq.s32.totalorder %s43, 0
      %p190 = por %p188, %p189
      %p191 = scmp.ne.s32.totalorder %s177, %s178
      %p192 = scmp.eq.s32.totalorder %s44, 4
      %p193 = por %p191, %p192
      %p195 = scmp.ne.s32.totalorder %s178, %s194
      %p196 = scmp.eq.s32.totalorder %s44, 0
      %p197 = por %p195, %p196
      %s198 = sld [smem:[#allocation3 + %s38]]
      %s199 = sld [smem:[#allocation3 + %s45]]
      %s200 = ssub.s32 %s198, %s199
      %p201 = scmp.eq.s32.totalorder %s200, 0
      %s203 = sadd.s32 %s202, 1
      %s204 = scalar_select %p201, %s202, %s203
      %p207 = pneg %p201
      %p208 = scmp.eq.s32.totalorder %s38, 4
      %p209 = por %p207, %p208
      %p210 = scmp.ne.s32.totalorder %s202, %s205
      %p211 = scmp.eq.s32.totalorder %s38, 0
      %p212 = por %p210, %p211
      %p213 = scmp.ne.s32.totalorder %s202, %s205
      %p214 = scmp.eq.s32.totalorder %s43, 4
      %p215 = por %p213, %p214
      %p216 = scmp.ne.s32.totalorder %s205, %s206
      %p217 = scmp.eq.s32.totalorder %s43, 0
      %p218 = por %p216, %p217
      %p219 = scmp.ne.s32.totalorder %s205, %s206
      %p220 = scmp.eq.s32.totalorder %s44, 4
      %p221 = por %p219, %p220
      %p223 = scmp.ne.s32.totalorder %s206, %s222
      %p224 = scmp.eq.s32.totalorder %s44, 0
      %p225 = por %p223, %p224
      %s226 = sld [smem:[#allocation3 + %s38]]
      %s227 = sld [smem:[#allocation3 + %s45]]
      %s228 = ssub.s32 %s226, %s227
      %p229 = scmp.eq.s32.totalorder %s228, 0
      %s231 = sadd.s32 %s230, 1
      %s232 = scalar_select %p229, %s230, %s231
      %p235 = pneg %p229
      %p236 = scmp.eq.s32.totalorder %s38, 4
      %p237 = por %p235, %p236
      %p238 = scmp.ne.s32.totalorder %s230, %s233
      %p239 = scmp.eq.s32.totalorder %s38, 0
      %p240 = por %p238, %p239
      %p241 = scmp.ne.s32.totalorder %s230, %s233
      %p242 = scmp.eq.s32.totalorder %s43, 4
      %p243 = por %p241, %p242
      %p244 = scmp.ne.s32.totalorder %s233, %s234
      %p245 = scmp.eq.s32.totalorder %s43, 0
      %p246 = por %p244, %p245
      %p247 = scmp.ne.s32.totalorder %s233, %s234
      %p248 = scmp.eq.s32.totalorder %s44, 4
      %p249 = por %p247, %p248
      %p251 = scmp.ne.s32.totalorder %s234, %s250
      %p252 = scmp.eq.s32.totalorder %s44, 0
      %p253 = por %p251, %p252
      %s254 = sld [smem:[#allocation3 + %s38]]
      %s255 = sld [smem:[#allocation3 + %s45]]
      %s256 = ssub.s32 %s254, %s255
      %p257 = scmp.eq.s32.totalorder %s256, 0
      %s259 = sadd.s32 %s258, 1
      %s260 = scalar_select %p257, %s258, %s259
      %p263 = pneg %p257
      %p264 = scmp.eq.s32.totalorder %s38, 4
      %p265 = por %p263, %p264
      %p266 = scmp.ne.s32.totalorder %s258, %s261
      %p267 = scmp.eq.s32.totalorder %s38, 0
      %p268 = por %p266, %p267
      %p269 = scmp.ne.s32.totalorder %s258, %s261
      %p270 = scmp.eq.s32.totalorder %s43, 4
      %p271 = por %p269, %p270
      %p272 = scmp.ne.s32.totalorder %s261, %s262
      %p273 = scmp.eq.s32.totalorder %s43, 0
      %p274 = por %p272, %p273
      %p275 = scmp.ne.s32.totalorder %s261, %s262
      %p276 = scmp.eq.s32.totalorder %s44, 4
      %p277 = por %p275, %p276
      %p279 = scmp.ne.s32.totalorder %s262, %s278
      %p280 = scmp.eq.s32.totalorder %s44, 0
      %p281 = por %p279, %p280
      %s282 = sld [smem:[#allocation3 + %s38]]
      %s283 = sld [smem:[#allocation3 + %s45]]
      %s284 = ssub.s32 %s282, %s283
      %p285 = scmp.eq.s32.totalorder %s284, 0
      %s287 = sadd.s32 %s286, 1
      %s288 = scalar_select %p285, %s286, %s287
      %p291 = pneg %p285
      %p292 = scmp.eq.s32.totalorder %s38, 4
      %p293 = por %p291, %p292
      %p294 = scmp.ne.s32.totalorder %s286, %s289
      %p295 = scmp.eq.s32.totalorder %s38, 0
      %p296 = por %p294, %p295
      %p297 = scmp.ne.s32.totalorder %s286, %s289
      %p298 = scmp.eq.s32.totalorder %s43, 4
      %p299 = por %p297, %p298
      %p300 = scmp.ne.s32.totalorder %s289, %s290
      %p301 = scmp.eq.s32.totalorder %s43, 0
      %p302 = por %p300, %p301
      %p303 = scmp.ne.s32.totalorder %s289, %s290
      %p304 = scmp.eq.s32.totalorder %s44, 4
      %p305 = por %p303, %p304
      %p307 = scmp.ne.s32.totalorder %s290, %s306
      %p308 = scmp.eq.s32.totalorder %s44, 0
      %p309 = por %p307, %p308
      %s310 = sld [smem:[#allocation3 + %s38]]
      %s311 = sld [smem:[#allocation3 + %s45]]
      %s312 = ssub.s32 %s310, %s311
      %p313 = scmp.eq.s32.totalorder %s312, 0
      %s315 = sadd.s32 %s314, 1
      %s316 = scalar_select %p313, %s314, %s315
      %p319 = pneg %p313
      %p320 = scmp.eq.s32.totalorder %s38, 4
      %p321 = por %p319, %p320
      %p322 = scmp.ne.s32.totalorder %s314, %s317
      %p323 = scmp.eq.s32.totalorder %s38, 0
      %p324 = por %p322, %p323
      %p325 = scmp.ne.s32.totalorder %s314, %s317
      %p326 = scmp.eq.s32.totalorder %s43, 4
      %p327 = por %p325, %p326
      %p328 = scmp.ne.s32.totalorder %s317, %s318
      %p329 = scmp.eq.s32.totalorder %s43, 0
      %p330 = por %p328, %p329
      %p331 = scmp.ne.s32.totalorder %s317, %s318
      %p332 = scmp.eq.s32.totalorder %s44, 4
      %p333 = por %p331, %p332
      %p335 = scmp.ne.s32.totalorder %s318, %s334
      %p336 = scmp.eq.s32.totalorder %s44, 0
      %p337 = por %p335, %p336
      %s338 = sld [smem:[#allocation3 + %s38]]
      %s339 = sld [smem:[#allocation3 + %s45]]
      %s340 = ssub.s32 %s338, %s339
      %p341 = scmp.eq.s32.totalorder %s340, 0
      %s343 = sadd.s32 %s342, 1
      %s344 = scalar_select %p341, %s342, %s343
      %p347 = pneg %p341
      %p348 = scmp.eq.s32.totalorder %s38, 4
      %p349 = por %p347, %p348
      %p350 = scmp.ne.s32.totalorder %s342, %s345
      %p351 = scmp.eq.s32.totalorder %s38, 0
      %p352 = por %p350, %p351
      %p353 = scmp.ne.s32.totalorder %s342, %s345
      %p354 = scmp.eq.s32.totalorder %s43, 4
      %p355 = por %p353, %p354
      %p356 = scmp.ne.s32.totalorder %s345, %s346
      %p357 = scmp.eq.s32.totalorder %s43, 0
      %p358 = por %p356, %p357
      %p359 = scmp.ne.s32.totalorder %s345, %s346
      %p360 = scmp.eq.s32.totalorder %s44, 4
      %p361 = por %p359, %p360
      %p363 = scmp.ne.s32.totalorder %s346, %s362
      %p364 = scmp.eq.s32.totalorder %s44, 0
      %p365 = por %p363, %p364
      %s366 = sld [smem:[#allocation3 + %s38]]
      %s367 = sld [smem:[#allocation3 + %s45]]
      %s368 = ssub.s32 %s366, %s367
      %p369 = scmp.eq.s32.totalorder %s368, 0
      %s371 = sadd.s32 %s370, 1
      %s372 = scalar_select %p369, %s370, %s371
      %p375 = pneg %p369
      %p376 = scmp.eq.s32.totalorder %s38, 4
      %p377 = por %p375, %p376
      %p378 = scmp.ne.s32.totalorder %s370, %s373
      %p379 = scmp.eq.s32.totalorder %s38, 0
      %p380 = por %p378, %p379
      %p381 = scmp.ne.s32.totalorder %s370, %s373
      %p382 = scmp.eq.s32.totalorder %s43, 4
      %p383 = por %p381, %p382
      %p384 = scmp.ne.s32.totalorder %s373, %s374
      %p385 = scmp.eq.s32.totalorder %s43, 0
      %p386 = por %p384, %p385
      %p387 = scmp.ne.s32.totalorder %s373, %s374
      %p388 = scmp.eq.s32.totalorder %s44, 4
      %p389 = por %p387, %p388
      %p391 = scmp.ne.s32.totalorder %s374, %s390
      %p392 = scmp.eq.s32.totalorder %s44, 0
      %p393 = por %p391, %p392
      %s394 = sld [smem:[#allocation3 + %s38]]
      %s395 = sld [smem:[#allocation3 + %s45]]
      %s396 = ssub.s32 %s394, %s395
      %p397 = scmp.eq.s32.totalorder %s396, 0
      %s399 = sadd.s32 %s398, 1
      %s400 = scalar_select %p397, %s398, %s399
      %p403 = pneg %p397
      %p404 = scmp.eq.s32.totalorder %s38, 4
      %p405 = por %p403, %p404
      %p406 = scmp.ne.s32.totalorder %s398, %s401
      %p407 = scmp.eq.s32.totalorder %s38, 0
      %p408 = por %p406, %p407
      %p409 = scmp.ne.s32.totalorder %s398, %s401
      %p410 = scmp.eq.s32.totalorder %s43, 4
      %p411 = por %p409, %p410
      %p412 = scmp.ne.s32.totalorder %s401, %s402
      %p413 = scmp.eq.s32.totalorder %s43, 0
      %p414 = por %p412, %p413
      %p415 = scmp.ne.s32.totalorder %s401, %s402
      %p416 = scmp.eq.s32.totalorder %s44, 4
      %p417 = por %p415, %p416
      %p419 = scmp.ne.s32.totalorder %s402, %s418
      %p420 = scmp.eq.s32.totalorder %s44, 0
      %p421 = por %p419, %p420
      %s422 = ssub.s32 %s38, %s45
      %p423 = scmp.eq.s32.totalorder %s422, 0
      %s425 = sadd.s32 %s424, 1
      %s426 = scalar_select %p423, %s424, %s425
      %p429 = pneg %p423
      %p430 = scmp.eq.s32.totalorder %s38, 4
      %p431 = por %p429, %p430
      %p432 = scmp.ne.s32.totalorder %s424, %s427
      %p433 = scmp.eq.s32.totalorder %s38, 0
      %p434 = por %p432, %p433
      %p435 = scmp.ne.s32.totalorder %s424, %s427
      %p436 = scmp.eq.s32.totalorder %s43, 4
      %p437 = por %p435, %p436
      %p438 = scmp.ne.s32.totalorder %s427, %s428
      %p439 = scmp.eq.s32.totalorder %s43, 0
      %p440 = por %p438, %p439
      %p441 = scmp.ne.s32.totalorder %s427, %s428
      %p442 = scmp.eq.s32.totalorder %s44, 4
      %p443 = por %p441, %p442
      %p445 = scmp.ne.s32.totalorder %s428, %s444
      %p446 = scmp.eq.s32.totalorder %s44, 0
      %p447 = por %p445, %p446
      %p448 = scmp.le.s32.totalorder 1, %s38
      %p449 = scmp.lt.s32.totalorder %s38, 6
      %p450 = pnand %p448, %p449
      %p451 = pneg %p450
      // Predicated region
      $region9: #{tpu_custom_call.1} parent=5 // pred_check
        _
      $region10: #{tpu_custom_call.1} parent=5 // pred_check_branch
        %453 = sbr.rel (%p450) target = $region12
      $region11: #{tpu_custom_call.1} parent=5 // pred_region
        %s454 = ssub.s32 %s38, 1
        // Predicated region
        $region13: #{tpu_custom_call.1} parent=11 // pred_check
          %p455 = pneg %p85
        $region14: #{tpu_custom_call.1} parent=11 // pred_check_branch
          %457 = sbr.rel (%p455) target = $region16
        $region15: #{tpu_custom_call.1} parent=11 // pred_region
          %s459 = ssub.s32 4096, 4096
          %460 = vsyncadd [#allocation8], %s459
          %s461 = sshll.u32 [#allocation7], 4
          %s462 = int_to_ptr.vmem [resolvable:$true] %s461
          %467 = dma.hbm_to_vmem [thread:$0]  %s2, 4096, %s462, [#allocation8], 128, 128, 8
        $region16: #{tpu_custom_call.1} parent=11 // pred_fallthru
          _
        // Predicated region
        $region17: #{tpu_custom_call.1} parent=11 // pred_check
          %p468 = pneg %p106
        $region18: #{tpu_custom_call.1} parent=11 // pred_check_branch
          %470 = sbr.rel (%p468) target = $region20
        $region19: #{tpu_custom_call.1} parent=11 // pred_region
          %s472 = ssub.s32 16, 16
          %473 = vsyncadd [#allocation8], %s472
          %s475 = sshll.u32 [#allocation9], 4
          %s476 = int_to_ptr.vmem [resolvable:$true] %s475
          %478 = dma.hbm_to_vmem [thread:$0]  %s3, 16, %s476, [#allocation8]
        $region20: #{tpu_custom_call.1} parent=11 // pred_fallthru
          _
      $region12: #{tpu_custom_call.1} parent=5 // pred_fallthru
        _
      %p479 = scmp.lt.s32.totalorder %s38, 5
      // Predicated region
      $region21: #{tpu_custom_call.1} parent=5 // pred_check
        %p480 = pneg %p479
      $region22: #{tpu_custom_call.1} parent=5 // pred_check_branch
        %482 = sbr.rel (%p480) target = $region24
      $region23: #{tpu_custom_call.1} parent=5 // pred_region
        // Predicated region
        $region25: #{tpu_custom_call.1} parent=23 // pred_check
          %p483 = pneg %p58
        $region26: #{tpu_custom_call.1} parent=23 // pred_check_branch
          %485 = sbr.rel (%p483) target = $region28
        $region27: #{tpu_custom_call.1} parent=23 // pred_region
          %s486 = sand.u32 %s48, 1
          %s487 = scalar_lea.sflag [#allocation5], %s486
          %s488 = sand.u32 %s48, 1
          %s489 = smul.addr %s488, 16
          %s490 = scalar_lea.vmem [#allocation4], %s489
          %s492 = ssub.s32 256, 256
          %493 = vsyncadd %s487, %s492
          %s494 = smul.addr %s38, 2
          %s495 = smul.addr %s494, 128
          %s496 = scalar_lea.hbm %s1, %s495
          %s498 = sshll.u32 %s490, 4
          %s499 = int_to_ptr.vmem [resolvable:$true] %s498
          %501 = dma.hbm_to_vmem [thread:$0]  %s496, 256, %s499, %s487
        $region28: #{tpu_custom_call.1} parent=23 // pred_fallthru
          _
        // Predicated region
        $region29: #{tpu_custom_call.1} parent=23 // pred_check
          %p502 = pneg %p128
        $region30: #{tpu_custom_call.1} parent=23 // pred_check_branch
          %504 = sbr.rel (%p502) target = $region32
        $region31: #{tpu_custom_call.1} parent=23 // pred_region
          %s505 = sand.u32 %s38, 1
          %s506 = scalar_lea.sflag [#allocation11], %s505
          %s507 = sand.u32 %s118, 1
          %s508 = smul.addr %s507, 128
          %s509 = scalar_lea.vmem [#allocation10], %s508
          %s510 = sld [smem:[#allocation3 + %s38]]
          %s512 = ssub.s32 2048, 2048
          %513 = vsyncadd %s506, %s512
          %s514 = smul.addr %s510, 16
          %s515 = smul.addr %s514, 128
          %s516 = scalar_lea.hbm %s4, %s515
          %s517 = sshll.u32 %s509, 4
          %s518 = int_to_ptr.vmem [resolvable:$true] %s517
          %523 = dma.hbm_to_vmem [thread:$0]  %s516, 2048, %s518, %s506, 128, 128, 8
        $region32: #{tpu_custom_call.1} parent=23 // pred_fallthru
          _
        // Predicated region
        $region33: #{tpu_custom_call.1} parent=23 // pred_check
          %p524 = pneg %p156
        $region34: #{tpu_custom_call.1} parent=23 // pred_check_branch
          %526 = sbr.rel (%p524) target = $region36
        $region35: #{tpu_custom_call.1} parent=23 // pred_region
          %s527 = sld [smem:[#allocation3 + %s38]]
          %p528 = scmp.lt.s32.totalorder %s527, 2
          %s529 = scalar_select %p528, %s527, 2
          %s530 = scalar_lea.vmem %s5, %s529
          %s531 = sld [smem:[#allocation3 + %s38]]
        $region36: #{tpu_custom_call.1} parent=23 // pred_fallthru
          _
        // Predicated region
        $region37: #{tpu_custom_call.1} parent=23 // pred_check
          %p532 = pneg %p184
        $region38: #{tpu_custom_call.1} parent=23 // pred_check_branch
          %534 = sbr.rel (%p532) target = $region40
        $region39: #{tpu_custom_call.1} parent=23 // pred_region
          %s535 = sand.u32 %s38, 1
          %s536 = scalar_lea.sflag [#allocation11], %s535
          %s537 = sand.u32 %s174, 1
          %s538 = smul.addr %s537, 128
          %s539 = scalar_lea.vmem [#allocation12], %s538
          %s540 = sld [smem:[#allocation3 + %s38]]
          %s542 = ssub.s32 2048, 2048
          %543 = vsyncadd %s536, %s542
          %s544 = smul.addr %s540, 16
          %s545 = smul.addr %s544, 128
          %s546 = scalar_lea.hbm %s6, %s545
          %s547 = sshll.u32 %s539, 4
          %s548 = int_to_ptr.vmem [resolvable:$true] %s547
          %553 = dma.hbm_to_vmem [thread:$0]  %s546, 2048, %s548, %s536, 128, 128, 8
        $region40: #{tpu_custom_call.1} parent=23 // pred_fallthru
          _
        // Predicated region
        $region41: #{tpu_custom_call.1} parent=23 // pred_check
          %p554 = pneg %p212
        $region42: #{tpu_custom_call.1} parent=23 // pred_check_branch
          %556 = sbr.rel (%p554) target = $region44
        $region43: #{tpu_custom_call.1} parent=23 // pred_region
          %s557 = sld [smem:[#allocation3 + %s38]]
          %p558 = scmp.lt.s32.totalorder %s557, 2
          %s559 = scalar_select %p558, %s557, 2
          %s560 = scalar_lea.vmem %s7, %s559
          %s561 = sld [smem:[#allocation3 + %s38]]
        $region44: #{tpu_custom_call.1} parent=23 // pred_fallthru
          _
        // Predicated region
        $region45: #{tpu_custom_call.1} parent=23 // pred_check
          %p562 = pneg %p240
        $region46: #{tpu_custom_call.1} parent=23 // pred_check_branch
          %564 = sbr.rel (%p562) target = $region48
        $region47: #{tpu_custom_call.1} parent=23 // pred_region
          %s565 = sand.u32 %s38, 1
          %s566 = scalar_lea.sflag [#allocation14], %s565
          %s567 = sand.u32 %s230, 1
          %s568 = smul.addr %s567, 128
          %s569 = scalar_lea.vmem [#allocation13], %s568
          %s570 = sld [smem:[#allocation3 + %s38]]
          %s572 = ssub.s32 2048, 2048
          %573 = vsyncadd %s566, %s572
          %s574 = smul.addr %s570, 16
          %s575 = smul.addr %s574, 128
          %s576 = scalar_lea.hbm %s8, %s575
          %s577 = sshll.u32 %s569, 4
          %s578 = int_to_ptr.vmem [resolvable:$true] %s577
          %583 = dma.hbm_to_vmem [thread:$0]  %s576, 2048, %s578, %s566, 128, 128, 8
        $region48: #{tpu_custom_call.1} parent=23 // pred_fallthru
          _
        // Predicated region
        $region49: #{tpu_custom_call.1} parent=23 // pred_check
          %p584 = pneg %p268
        $region50: #{tpu_custom_call.1} parent=23 // pred_check_branch
          %586 = sbr.rel (%p584) target = $region52
        $region51: #{tpu_custom_call.1} parent=23 // pred_region
          %s587 = sld [smem:[#allocation3 + %s38]]
          %p588 = scmp.lt.s32.totalorder %s587, 2
          %s589 = scalar_select %p588, %s587, 2
          %s590 = scalar_lea.vmem %s9, %s589
          %s591 = sld [smem:[#allocation3 + %s38]]
        $region52: #{tpu_custom_call.1} parent=23 // pred_fallthru
          _
        // Predicated region
        $region53: #{tpu_custom_call.1} parent=23 // pred_check
          %p592 = pneg %p296
        $region54: #{tpu_custom_call.1} parent=23 // pred_check_branch
          %594 = sbr.rel (%p592) target = $region56
        $region55: #{tpu_custom_call.1} parent=23 // pred_region
          %s595 = sand.u32 %s38, 1
          %s596 = scalar_lea.sflag [#allocation14], %s595
          %s597 = sand.u32 %s286, 1
          %s598 = smul.addr %s597, 128
          %s599 = scalar_lea.vmem [#allocation15], %s598
          %s600 = sld [smem:[#allocation3 + %s38]]
          %s602 = ssub.s32 2048, 2048
          %603 = vsyncadd %s596, %s602
          %s604 = smul.addr %s600, 16
          %s605 = smul.addr %s604, 128
          %s606 = scalar_lea.hbm %s10, %s605
          %s607 = sshll.u32 %s599, 4
          %s608 = int_to_ptr.vmem [resolvable:$true] %s607
          %613 = dma.hbm_to_vmem [thread:$0]  %s606, 2048, %s608, %s596, 128, 128, 8
        $region56: #{tpu_custom_call.1} parent=23 // pred_fallthru
          _
        // Predicated region
        $region57: #{tpu_custom_call.1} parent=23 // pred_check
          %p614 = pneg %p324
        $region58: #{tpu_custom_call.1} parent=23 // pred_check_branch
          %616 = sbr.rel (%p614) target = $region60
        $region59: #{tpu_custom_call.1} parent=23 // pred_region
          %s617 = sld [smem:[#allocation3 + %s38]]
          %p618 = scmp.lt.s32.totalorder %s617, 2
          %s619 = scalar_select %p618, %s617, 2
          %s620 = scalar_lea.vmem %s11, %s619
          %s621 = sld [smem:[#allocation3 + %s38]]
        $region60: #{tpu_custom_call.1} parent=23 // pred_fallthru
          _
        // Predicated region
        $region61: #{tpu_custom_call.1} parent=23 // pred_check
          %p622 = pneg %p352
        $region62: #{tpu_custom_call.1} parent=23 // pred_check_branch
          %624 = sbr.rel (%p622) target = $region64
        $region63: #{tpu_custom_call.1} parent=23 // pred_region
          %s625 = sld [smem:[#allocation3 + %s38]]
          %p626 = scmp.lt.s32.totalorder %s625, 2
          %s627 = scalar_select %p626, %s625, 2
          %s628 = scalar_lea.vmem %s12, %s627
          %s629 = sld [smem:[#allocation3 + %s38]]
        $region64: #{tpu_custom_call.1} parent=23 // pred_fallthru
          _
        // Predicated region
        $region65: #{tpu_custom_call.1} parent=23 // pred_check
          %p630 = pneg %p380
        $region66: #{tpu_custom_call.1} parent=23 // pred_check_branch
          %632 = sbr.rel (%p630) target = $region68
        $region67: #{tpu_custom_call.1} parent=23 // pred_region
          %s633 = sld [smem:[#allocation3 + %s38]]
          %p634 = scmp.lt.s32.totalorder %s633, 2
          %s635 = scalar_select %p634, %s633, 2
          %s636 = scalar_lea.vmem %s13, %s635
          %s637 = sld [smem:[#allocation3 + %s38]]
        $region68: #{tpu_custom_call.1} parent=23 // pred_fallthru
          _
        // Predicated region
        $region69: #{tpu_custom_call.1} parent=23 // pred_check
          %p638 = pneg %p408
        $region70: #{tpu_custom_call.1} parent=23 // pred_check_branch
          %640 = sbr.rel (%p638) target = $region72
        $region71: #{tpu_custom_call.1} parent=23 // pred_region
          %s641 = sld [smem:[#allocation3 + %s38]]
          %p642 = scmp.lt.s32.totalorder %s641, 2
          %s643 = scalar_select %p642, %s641, 2
          %s644 = scalar_lea.vmem %s14, %s643
          %s645 = sld [smem:[#allocation3 + %s38]]
        $region72: #{tpu_custom_call.1} parent=23 // pred_fallthru
          _
      $region24: #{tpu_custom_call.1} parent=5 // pred_fallthru
        _
      %p646 = scmp.le.s32.totalorder 1, %s38
      %p647 = scmp.lt.s32.totalorder %s38, 6
      %p648 = pnand %p646, %p647
      %p649 = pneg %p648
      // Predicated region
      $region73: #{tpu_custom_call.1} parent=5 // pred_check
        _
      $region74: #{tpu_custom_call.1} parent=5 // pred_check_branch
        %651 = sbr.rel (%p648) target = $region76
      $region75: #{tpu_custom_call.1} parent=5 // pred_region
        %s652 = ssub.s32 %s38, 1
        %s653 = sand.u32 %s51, 1
        %s654 = scalar_lea.sflag [#allocation5], %s653
        %s655 = sand.u32 %s51, 1
        %s656 = smul.addr %s655, 16
        %s657 = scalar_lea.vmem [#allocation4], %s656
        // Predicated region
        $region77: #{tpu_custom_call.1} parent=75 // pred_check
          %p658 = pneg %p64
        $region78: #{tpu_custom_call.1} parent=75 // pred_check_branch
          %660 = sbr.rel (%p658) target = $region80
        $region79: #{tpu_custom_call.1} parent=75 // pred_region
          %661 = dma.done %s654, 256
        $region80: #{tpu_custom_call.1} parent=75 // pred_fallthru
          _
        // Predicated region
        $region81: #{tpu_custom_call.1} parent=75 // pred_check
          %p662 = pneg %p85
        $region82: #{tpu_custom_call.1} parent=75 // pred_check_branch
          %664 = sbr.rel (%p662) target = $region84
        $region83: #{tpu_custom_call.1} parent=75 // pred_region
          %665 = dma.done [#allocation8], 4096
        $region84: #{tpu_custom_call.1} parent=75 // pred_fallthru
          _
        // Predicated region
        $region85: #{tpu_custom_call.1} parent=75 // pred_check
          %p666 = pneg %p106
        $region86: #{tpu_custom_call.1} parent=75 // pred_check_branch
          %668 = sbr.rel (%p666) target = $region88
        $region87: #{tpu_custom_call.1} parent=75 // pred_region
          %669 = dma.done [#allocation8], 16
        $region88: #{tpu_custom_call.1} parent=75 // pred_fallthru
          _
        %s670 = sand.u32 %s43, 1
        %s671 = scalar_lea.sflag [#allocation11], %s670
        %s672 = sand.u32 %s121, 1
        %s673 = smul.addr %s672, 128
        %s674 = scalar_lea.vmem [#allocation10], %s673
        // Predicated region
        $region89: #{tpu_custom_call.1} parent=75 // pred_check
          %p675 = pneg %p134
        $region90: #{tpu_custom_call.1} parent=75 // pred_check_branch
          %677 = sbr.rel (%p675) target = $region92
        $region91: #{tpu_custom_call.1} parent=75 // pred_region
          %678 = dma.done %s671, 2048
        $region92: #{tpu_custom_call.1} parent=75 // pred_fallthru
          _
        %s679 = sand.u32 %s43, 1
        %s680 = scalar_lea.sflag [#allocation11], %s679
        %s681 = sand.u32 %s177, 1
        %s682 = smul.addr %s681, 128
        %s683 = scalar_lea.vmem [#allocation12], %s682
        // Predicated region
        $region93: #{tpu_custom_call.1} parent=75 // pred_check
          %p684 = pneg %p190
        $region94: #{tpu_custom_call.1} parent=75 // pred_check_branch
          %686 = sbr.rel (%p684) target = $region96
        $region95: #{tpu_custom_call.1} parent=75 // pred_region
          %687 = dma.done %s680, 2048
        $region96: #{tpu_custom_call.1} parent=75 // pred_fallthru
          _
        %s688 = sand.u32 %s43, 1
        %s689 = scalar_lea.sflag [#allocation14], %s688
        %s690 = sand.u32 %s233, 1
        %s691 = smul.addr %s690, 128
        %s692 = scalar_lea.vmem [#allocation13], %s691
        // Predicated region
        $region97: #{tpu_custom_call.1} parent=75 // pred_check
          %p693 = pneg %p246
        $region98: #{tpu_custom_call.1} parent=75 // pred_check_branch
          %695 = sbr.rel (%p693) target = $region100
        $region99: #{tpu_custom_call.1} parent=75 // pred_region
          %696 = dma.done %s689, 2048
        $region100: #{tpu_custom_call.1} parent=75 // pred_fallthru
          _
        %s697 = sand.u32 %s43, 1
        %s698 = scalar_lea.sflag [#allocation14], %s697
        %s699 = sand.u32 %s289, 1
        %s700 = smul.addr %s699, 128
        %s701 = scalar_lea.vmem [#allocation15], %s700
        // Predicated region
        $region101: #{tpu_custom_call.1} parent=75 // pred_check
          %p702 = pneg %p302
        $region102: #{tpu_custom_call.1} parent=75 // pred_check_branch
          %704 = sbr.rel (%p702) target = $region104
        $region103: #{tpu_custom_call.1} parent=75 // pred_region
          %705 = dma.done %s698, 2048
        $region104: #{tpu_custom_call.1} parent=75 // pred_fallthru
          _
        %s706 = sand.u32 %s51, 1
        %s707 = scalar_lea.sflag [#allocation5], %s706
        %s708 = sand.u32 %s51, 1
        %s709 = smul.addr %s708, 16
        %s710 = scalar_lea.vmem [#allocation4], %s709
        %p711 = pneg %p64
        %p712 = pneg %p61
        %p713 = pneg %p85
        %p714 = pneg %p82
        %p715 = pneg %p106
        %p716 = pneg %p103
        %s717 = sand.u32 %s43, 1
        %s718 = scalar_lea.sflag [#allocation11], %s717
        %s719 = sand.u32 %s121, 1
        %s720 = smul.addr %s719, 128
        %s721 = scalar_lea.vmem [#allocation10], %s720
        %p722 = pneg %p134
        %p723 = pneg %p131
        %s724 = sld [smem:[#allocation3 + %s43]]
        %p725 = scmp.lt.s32.totalorder %s724, 2
        %s726 = scalar_select %p725, %s724, 2
        %s727 = scalar_lea.vmem %s5, %s726
        %p728 = pneg %p162
        %p729 = pneg %p159
        %s730 = sand.u32 %s43, 1
        %s731 = scalar_lea.sflag [#allocation11], %s730
        %s732 = sand.u32 %s177, 1
        %s733 = smul.addr %s732, 128
        %s734 = scalar_lea.vmem [#allocation12], %s733
        %p735 = pneg %p190
        %p736 = pneg %p187
        %s737 = sld [smem:[#allocation3 + %s43]]
        %p738 = scmp.lt.s32.totalorder %s737, 2
        %s739 = scalar_select %p738, %s737, 2
        %s740 = scalar_lea.vmem %s7, %s739
        %p741 = pneg %p218
        %p742 = pneg %p215
        %s743 = sand.u32 %s43, 1
        %s744 = scalar_lea.sflag [#allocation14], %s743
        %s745 = sand.u32 %s233, 1
        %s746 = smul.addr %s745, 128
        %s747 = scalar_lea.vmem [#allocation13], %s746
        %p748 = pneg %p246
        %p749 = pneg %p243
        %s750 = sld [smem:[#allocation3 + %s43]]
        %p751 = scmp.lt.s32.totalorder %s750, 2
        %s752 = scalar_select %p751, %s750, 2
        %s753 = scalar_lea.vmem %s9, %s752
        %p754 = pneg %p274
        %p755 = pneg %p271
        %s756 = sand.u32 %s43, 1
        %s757 = scalar_lea.sflag [#allocation14], %s756
        %s758 = sand.u32 %s289, 1
        %s759 = smul.addr %s758, 128
        %s760 = scalar_lea.vmem [#allocation15], %s759
        %p761 = pneg %p302
        %p762 = pneg %p299
        %s763 = sld [smem:[#allocation3 + %s43]]
        %p764 = scmp.lt.s32.totalorder %s763, 2
        %s765 = scalar_select %p764, %s763, 2
        %s766 = scalar_lea.vmem %s11, %s765
        %p767 = pneg %p330
        %p768 = pneg %p327
        %s769 = sld [smem:[#allocation3 + %s43]]
        %p770 = scmp.lt.s32.totalorder %s769, 2
        %s771 = scalar_select %p770, %s769, 2
        %s772 = scalar_lea.vmem %s12, %s771
        %p773 = pneg %p358
        %p774 = pneg %p355
        %s775 = sld [smem:[#allocation3 + %s43]]
        %p776 = scmp.lt.s32.totalorder %s775, 2
        %s777 = scalar_select %p776, %s775, 2
        %s778 = scalar_lea.vmem %s13, %s777
        %p779 = pneg %p386
        %p780 = pneg %p383
        %s781 = sld [smem:[#allocation3 + %s43]]
        %p782 = scmp.lt.s32.totalorder %s781, 2
        %s783 = scalar_select %p782, %s781, 2
        %s784 = scalar_lea.vmem %s14, %s783
        %p785 = pneg %p414
        %p786 = pneg %p411
        %p787 = pneg %p440
        %p788 = pneg %p437
        %s789 = sand.u32 %s427, 1
        %s790 = scalar_lea.sflag [#allocation6], %s789
        %s791 = sand.u32 %s427, 1
        %s792 = smul.addr %s791, 8
        %s793 = scalar_lea.vmem [#allocation16], %s792
        %s794 = sld [smem:[#allocation3 + %s43]]
        %s795 = sld [smem:[#allocation3 + %s43]]
        %p796 = scmp.lt.s32.totalorder %s795, 2
        %s797 = scalar_select %p796, %s795, 2
        %s798 = scalar_lea.vmem %s5, %s797
        %s799 = sld [smem:[#allocation3 + %s43]]
        %s800 = sld [smem:[#allocation3 + %s43]]
        %s801 = sld [smem:[#allocation3 + %s43]]
        %p802 = scmp.lt.s32.totalorder %s801, 2
        %s803 = scalar_select %p802, %s801, 2
        %s804 = scalar_lea.vmem %s7, %s803
        %s805 = sld [smem:[#allocation3 + %s43]]
        %s806 = sld [smem:[#allocation3 + %s43]]
        %s807 = sld [smem:[#allocation3 + %s43]]
        %p808 = scmp.lt.s32.totalorder %s807, 2
        %s809 = scalar_select %p808, %s807, 2
        %s810 = scalar_lea.vmem %s9, %s809
        %s811 = sld [smem:[#allocation3 + %s43]]
        %s812 = sld [smem:[#allocation3 + %s43]]
        %s813 = sld [smem:[#allocation3 + %s43]]
        %p814 = scmp.lt.s32.totalorder %s813, 2
        %s815 = scalar_select %p814, %s813, 2
        %s816 = scalar_lea.vmem %s11, %s815
        %s817 = sld [smem:[#allocation3 + %s43]]
        %s818 = sld [smem:[#allocation3 + %s43]]
        %p819 = scmp.lt.s32.totalorder %s818, 2
        %s820 = scalar_select %p819, %s818, 2
        %s821 = scalar_lea.vmem %s12, %s820
        %s822 = sld [smem:[#allocation3 + %s43]]
        %s823 = sld [smem:[#allocation3 + %s43]]
        %p824 = scmp.lt.s32.totalorder %s823, 2
        %s825 = scalar_select %p824, %s823, 2
        %s826 = scalar_lea.vmem %s13, %s825
        %s827 = sld [smem:[#allocation3 + %s43]]
        %s828 = sld [smem:[#allocation3 + %s43]]
        %p829 = scmp.lt.s32.totalorder %s828, 2
        %s830 = scalar_select %p829, %s828, 2
        %s831 = scalar_lea.vmem %s14, %s830
        %s832 = sld [smem:[#allocation3 + %s43]]
        %v833 = vld [vmem:[%s657] sm:$0xff]
        %v834 = vld [vmem:[%s657 + $0x8] sm:$0xff]
        %v835 = vld [vmem:[#allocation7] sm:$0xff]
        %v836 = vld [vmem:[#allocation7 + $0x8] sm:$0xff]
        %v837 = vld [vmem:[#allocation7 + $0x10] sm:$0xff]
        %v838 = vld [vmem:[#allocation7 + $0x18] sm:$0xff]
        %v839 = vld [vmem:[#allocation7 + $0x20] sm:$0xff]
        %v840 = vld [vmem:[#allocation7 + $0x28] sm:$0xff]
        %v841 = vld [vmem:[#allocation7 + $0x30] sm:$0xff]
        %v842 = vld [vmem:[#allocation7 + $0x38] sm:$0xff]
        %v843 = vld [vmem:[#allocation7 + $0x40] sm:$0xff]
        %v844 = vld [vmem:[#allocation7 + $0x48] sm:$0xff]
        %v845 = vld [vmem:[#allocation7 + $0x50] sm:$0xff]
        %v846 = vld [vmem:[#allocation7 + $0x58] sm:$0xff]
        %v847 = vld [vmem:[#allocation7 + $0x60] sm:$0xff]
        %v848 = vld [vmem:[#allocation7 + $0x68] sm:$0xff]
        %v849 = vld [vmem:[#allocation7 + $0x70] sm:$0xff]
        %v850 = vld [vmem:[#allocation7 + $0x78] sm:$0xff]
        %v851 = vld [vmem:[#allocation7 + $0x80] sm:$0xff]
        %v852 = vld [vmem:[#allocation7 + $0x88] sm:$0xff]
        %v853 = vld [vmem:[#allocation7 + $0x90] sm:$0xff]
        %v854 = vld [vmem:[#allocation7 + $0x98] sm:$0xff]
        %v855 = vld [vmem:[#allocation7 + $0xa0] sm:$0xff]
        %v856 = vld [vmem:[#allocation7 + $0xa8] sm:$0xff]
        %v857 = vld [vmem:[#allocation7 + $0xb0] sm:$0xff]
        %v858 = vld [vmem:[#allocation7 + $0xb8] sm:$0xff]
        %v859 = vld [vmem:[#allocation7 + $0xc0] sm:$0xff]
        %v860 = vld [vmem:[#allocation7 + $0xc8] sm:$0xff]
        %v861 = vld [vmem:[#allocation7 + $0xd0] sm:$0xff]
        %v862 = vld [vmem:[#allocation7 + $0xd8] sm:$0xff]
        %v863 = vld [vmem:[#allocation7 + $0xe0] sm:$0xff]
        %v864 = vld [vmem:[#allocation7 + $0xe8] sm:$0xff]
        %v865 = vld [vmem:[#allocation7 + $0xf0] sm:$0xff]
        %v866 = vld [vmem:[#allocation7 + $0xf8] sm:$0xff]
        %v867 = vld [vmem:[#allocation9] sm:$0x1]
        %v869 = vlaneseq
        %v870 = vshrl.u32 %v869, 7
        %v871 = vsub.s32 0, %v870
        %v872 = vrot.slane %v867, %v871
        %874 = vmatprep.subr.mxu0 0.0
        %875 = vmatpush1.msra.mxu0 %v835
        %876 = vmatprep.subr.mxu0 0.0
        %877 = vmatpush1.msra.mxu0 %v836
        %878 = vmatprep.subr.mxu0 0.0
        %879 = vmatpush1.msra.mxu0 %v837
        %880 = vmatprep.subr.mxu0 0.0
        %881 = vmatpush1.msra.mxu0 %v838
        %882 = vmatprep.subr.mxu0 0.0
        %883 = vmatpush1.msra.mxu0 %v839
        %884 = vmatprep.subr.mxu0 0.0
        %885 = vmatpush1.msra.mxu0 %v840
        %886 = vmatprep.subr.mxu0 0.0
        %887 = vmatpush1.msra.mxu0 %v841
        %888 = vmatprep.subr.mxu0 0.0
        %889 = vmatpush1.msra.mxu0 %v842
        %890 = vmatprep.subr.mxu0 0.0
        %891 = vmatpush1.msra.mxu0 %v843
        %892 = vmatprep.subr.mxu0 0.0
        %893 = vmatpush1.msra.mxu0 %v844
        %894 = vmatprep.subr.mxu0 0.0
        %895 = vmatpush1.msra.mxu0 %v845
        %896 = vmatprep.subr.mxu0 0.0
        %897 = vmatpush1.msra.mxu0 %v846
        %898 = vmatprep.subr.mxu0 0.0
        %899 = vmatpush1.msra.mxu0 %v847
        %900 = vmatprep.subr.mxu0 0.0
        %901 = vmatpush1.msra.mxu0 %v848
        %902 = vmatprep.subr.mxu0 0.0
        %903 = vmatpush1.msra.mxu0 %v849
        %904 = vmatprep.subr.mxu0 0.0
        %905 = vmatpush1.msra.mxu0 %v850
        %906 = vmatprep.subr.mxu0 0.0
        %907 = vmatpush1.msra.mxu0 %v851
        %908 = vmatprep.subr.mxu0 0.0
        %909 = vmatpush1.msra.mxu0 %v852
        %910 = vmatprep.subr.mxu0 0.0
        %911 = vmatpush1.msra.mxu0 %v853
        %912 = vmatprep.subr.mxu0 0.0
        %913 = vmatpush1.msra.mxu0 %v854
        %914 = vmatprep.subr.mxu0 0.0
        %915 = vmatpush1.msra.mxu0 %v855
        %916 = vmatprep.subr.mxu0 0.0
        %917 = vmatpush1.msra.mxu0 %v856
        %918 = vmatprep.subr.mxu0 0.0
        %919 = vmatpush1.msra.mxu0 %v857
        %920 = vmatprep.subr.mxu0 0.0
        %921 = vmatpush1.msra.mxu0 %v858
        %922 = vmatprep.subr.mxu0 0.0
        %923 = vmatpush1.msra.mxu0 %v859
        %924 = vmatprep.subr.mxu0 0.0
        %925 = vmatpush1.msra.mxu0 %v860
        %926 = vmatprep.subr.mxu0 0.0
        %927 = vmatpush1.msra.mxu0 %v861
        %928 = vmatprep.subr.mxu0 0.0
        %929 = vmatpush1.msra.mxu0 %v862
        %930 = vmatprep.subr.mxu0 0.0
        %931 = vmatpush1.msra.mxu0 %v863
        %932 = vmatprep.subr.mxu0 0.0
        %933 = vmatpush1.msra.mxu0 %v864
        %934 = vmatprep.subr.mxu0 0.0
        %935 = vmatpush1.msra.mxu0 %v865
        %936 = vmatprep.subr.mxu0 0.0
        %937 = vmatpush1.msra.mxu0 %v866
        %938 = vmatprep.mubr.f32.mxu0 %v834
        %939 = vmatmul.mubr.f32.gmra.mrb[0].mxu0 %v833
        %v940 = vpop.f32.mrb[0].mxu0
        %v941 = vadd.f32 %v872, %v940
        %v942 = vpop.f32.mrb[0].mxu0
        %943 = vdwg.mxu0
        %v944 = vmax.f32 %v941, 0.0
        %v945 = vld [vmem:[%s674] sm:$0xff]
        %v946 = vld [vmem:[%s674 + $0x8] sm:$0xff]
        %v947 = vld [vmem:[%s674 + $0x10] sm:$0xff]
        %v948 = vld [vmem:[%s674 + $0x18] sm:$0xff]
        %v949 = vld [vmem:[%s674 + $0x20] sm:$0xff]
        %v950 = vld [vmem:[%s674 + $0x28] sm:$0xff]
        %v951 = vld [vmem:[%s674 + $0x30] sm:$0xff]
        %v952 = vld [vmem:[%s674 + $0x38] sm:$0xff]
        %v953 = vld [vmem:[%s674 + $0x40] sm:$0xff]
        %v954 = vld [vmem:[%s674 + $0x48] sm:$0xff]
        %v955 = vld [vmem:[%s674 + $0x50] sm:$0xff]
        %v956 = vld [vmem:[%s674 + $0x58] sm:$0xff]
        %v957 = vld [vmem:[%s674 + $0x60] sm:$0xff]
        %v958 = vld [vmem:[%s674 + $0x68] sm:$0xff]
        %v959 = vld [vmem:[%s674 + $0x70] sm:$0xff]
        %v960 = vld [vmem:[%s674 + $0x78] sm:$0xff]
        %v961 = vld [vmem:[%s798] sm:$0x1]
        %v963 = vlaneseq
        %v964 = vshrl.u32 %v963, 7
        %v965 = vsub.s32 0, %v964
        %v966 = vrot.slane %v961, %v965
        %968 = vmatprep.subr.mxu0 0.0
        %969 = vmatpush1.msra.mxu0 %v945
        %970 = vmatprep.subr.mxu0 0.0
        %971 = vmatpush1.msra.mxu0 %v946
        %972 = vmatprep.subr.mxu0 0.0
        %973 = vmatpush1.msra.mxu0 %v947
        %974 = vmatprep.subr.mxu0 0.0
        %975 = vmatpush1.msra.mxu0 %v948
        %976 = vmatprep.subr.mxu0 0.0
        %977 = vmatpush1.msra.mxu0 %v949
        %978 = vmatprep.subr.mxu0 0.0
        %979 = vmatpush1.msra.mxu0 %v950
        %980 = vmatprep.subr.mxu0 0.0
        %981 = vmatpush1.msra.mxu0 %v951
        %982 = vmatprep.subr.mxu0 0.0
        %983 = vmatpush1.msra.mxu0 %v952
        %984 = vmatprep.subr.mxu0 0.0
        %985 = vmatpush1.msra.mxu0 %v953
        %986 = vmatprep.subr.mxu0 0.0
        %987 = vmatpush1.msra.mxu0 %v954
        %988 = vmatprep.subr.mxu0 0.0
        %989 = vmatpush1.msra.mxu0 %v955
        %990 = vmatprep.subr.mxu0 0.0
        %991 = vmatpush1.msra.mxu0 %v956
        %992 = vmatprep.subr.mxu0 0.0
        %993 = vmatpush1.msra.mxu0 %v957
        %994 = vmatprep.subr.mxu0 0.0
        %995 = vmatpush1.msra.mxu0 %v958
        %996 = vmatprep.subr.mxu0 0.0
        %997 = vmatpush1.msra.mxu0 %v959
        %998 = vmatprep.subr.mxu0 0.0
        %999 = vmatpush1.msra.mxu0 %v960
        %1000 = vmatprep.subr.mxu0 0.0
        %1001 = vmatpush1.msra.mxu0 0.0
        %1002 = vmatprep.subr.mxu0 0.0
        %1003 = vmatpush1.msra.mxu0 0.0
        %1004 = vmatprep.subr.mxu0 0.0
        %1005 = vmatpush1.msra.mxu0 0.0
        %1006 = vmatprep.subr.mxu0 0.0
        %1007 = vmatpush1.msra.mxu0 0.0
        %1008 = vmatprep.subr.mxu0 0.0
        %1009 = vmatpush1.msra.mxu0 0.0
        %1010 = vmatprep.subr.mxu0 0.0
        %1011 = vmatpush1.msra.mxu0 0.0
        %1012 = vmatprep.subr.mxu0 0.0
        %1013 = vmatpush1.msra.mxu0 0.0
        %1014 = vmatprep.subr.mxu0 0.0
        %1015 = vmatpush1.msra.mxu0 0.0
        %1016 = vmatprep.subr.mxu0 0.0
        %1017 = vmatpush1.msra.mxu0 0.0
        %1018 = vmatprep.subr.mxu0 0.0
        %1019 = vmatpush1.msra.mxu0 0.0
        %1020 = vmatprep.subr.mxu0 0.0
        %1021 = vmatpush1.msra.mxu0 0.0
        %1022 = vmatprep.subr.mxu0 0.0
        %1023 = vmatpush1.msra.mxu0 0.0
        %1024 = vmatprep.subr.mxu0 0.0
        %1025 = vmatpush1.msra.mxu0 0.0
        %1026 = vmatprep.subr.mxu0 0.0
        %1027 = vmatpush1.msra.mxu0 0.0
        %1028 = vmatprep.subr.mxu0 0.0
        %1029 = vmatpush1.msra.mxu0 0.0
        %1030 = vmatprep.subr.mxu0 0.0
        %1031 = vmatpush1.msra.mxu0 0.0
        %1032 = vmatprep.mubr.f32.mxu0 0.0
        %1033 = vmatmul.mubr.f32.gmra.mrb[0].mxu0 %v944
        %v1034 = vpop.f32.mrb[0].mxu0
        %v1035 = vadd.f32 %v966, %v1034
        %v1036 = vpop.f32.mrb[0].mxu0
        %1037 = vdwg.mxu0
        %v1038 = vmax.f32 %v1035, 0.0
        %v1039 = vld [vmem:[%s683] sm:$0xff]
        %v1040 = vld [vmem:[%s683 + $0x8] sm:$0xff]
        %v1041 = vld [vmem:[%s683 + $0x10] sm:$0xff]
        %v1042 = vld [vmem:[%s683 + $0x18] sm:$0xff]
        %v1043 = vld [vmem:[%s683 + $0x20] sm:$0xff]
        %v1044 = vld [vmem:[%s683 + $0x28] sm:$0xff]
        %v1045 = vld [vmem:[%s683 + $0x30] sm:$0xff]
        %v1046 = vld [vmem:[%s683 + $0x38] sm:$0xff]
        %v1047 = vld [vmem:[%s683 + $0x40] sm:$0xff]
        %v1048 = vld [vmem:[%s683 + $0x48] sm:$0xff]
        %v1049 = vld [vmem:[%s683 + $0x50] sm:$0xff]
        %v1050 = vld [vmem:[%s683 + $0x58] sm:$0xff]
        %v1051 = vld [vmem:[%s683 + $0x60] sm:$0xff]
        %v1052 = vld [vmem:[%s683 + $0x68] sm:$0xff]
        %v1053 = vld [vmem:[%s683 + $0x70] sm:$0xff]
        %v1054 = vld [vmem:[%s683 + $0x78] sm:$0xff]
        %v1055 = vld [vmem:[%s804] sm:$0x1]
        %v1057 = vlaneseq
        %v1058 = vshrl.u32 %v1057, 7
        %v1059 = vsub.s32 0, %v1058
        %v1060 = vrot.slane %v1055, %v1059
        %1062 = vmatprep.subr.mxu0 0.0
        %1063 = vmatpush1.msra.mxu0 %v1039
        %1064 = vmatprep.subr.mxu0 0.0
        %1065 = vmatpush1.msra.mxu0 %v1040
        %1066 = vmatprep.subr.mxu0 0.0
        %1067 = vmatpush1.msra.mxu0 %v1041
        %1068 = vmatprep.subr.mxu0 0.0
        %1069 = vmatpush1.msra.mxu0 %v1042
        %1070 = vmatprep.subr.mxu0 0.0
        %1071 = vmatpush1.msra.mxu0 %v1043
        %1072 = vmatprep.subr.mxu0 0.0
        %1073 = vmatpush1.msra.mxu0 %v1044
        %1074 = vmatprep.subr.mxu0 0.0
        %1075 = vmatpush1.msra.mxu0 %v1045
        %1076 = vmatprep.subr.mxu0 0.0
        %1077 = vmatpush1.msra.mxu0 %v1046
        %1078 = vmatprep.subr.mxu0 0.0
        %1079 = vmatpush1.msra.mxu0 %v1047
        %1080 = vmatprep.subr.mxu0 0.0
        %1081 = vmatpush1.msra.mxu0 %v1048
        %1082 = vmatprep.subr.mxu0 0.0
        %1083 = vmatpush1.msra.mxu0 %v1049
        %1084 = vmatprep.subr.mxu0 0.0
        %1085 = vmatpush1.msra.mxu0 %v1050
        %1086 = vmatprep.subr.mxu0 0.0
        %1087 = vmatpush1.msra.mxu0 %v1051
        %1088 = vmatprep.subr.mxu0 0.0
        %1089 = vmatpush1.msra.mxu0 %v1052
        %1090 = vmatprep.subr.mxu0 0.0
        %1091 = vmatpush1.msra.mxu0 %v1053
        %1092 = vmatprep.subr.mxu0 0.0
        %1093 = vmatpush1.msra.mxu0 %v1054
        %1094 = vmatprep.subr.mxu0 0.0
        %1095 = vmatpush1.msra.mxu0 0.0
        %1096 = vmatprep.subr.mxu0 0.0
        %1097 = vmatpush1.msra.mxu0 0.0
        %1098 = vmatprep.subr.mxu0 0.0
        %1099 = vmatpush1.msra.mxu0 0.0
        %1100 = vmatprep.subr.mxu0 0.0
        %1101 = vmatpush1.msra.mxu0 0.0
        %1102 = vmatprep.subr.mxu0 0.0
        %1103 = vmatpush1.msra.mxu0 0.0
        %1104 = vmatprep.subr.mxu0 0.0
        %1105 = vmatpush1.msra.mxu0 0.0
        %1106 = vmatprep.subr.mxu0 0.0
        %1107 = vmatpush1.msra.mxu0 0.0
        %1108 = vmatprep.subr.mxu0 0.0
        %1109 = vmatpush1.msra.mxu0 0.0
        %1110 = vmatprep.subr.mxu0 0.0
        %1111 = vmatpush1.msra.mxu0 0.0
        %1112 = vmatprep.subr.mxu0 0.0
        %1113 = vmatpush1.msra.mxu0 0.0
        %1114 = vmatprep.subr.mxu0 0.0
        %1115 = vmatpush1.msra.mxu0 0.0
        %1116 = vmatprep.subr.mxu0 0.0
        %1117 = vmatpush1.msra.mxu0 0.0
        %1118 = vmatprep.subr.mxu0 0.0
        %1119 = vmatpush1.msra.mxu0 0.0
        %1120 = vmatprep.subr.mxu0 0.0
        %1121 = vmatpush1.msra.mxu0 0.0
        %1122 = vmatprep.subr.mxu0 0.0
        %1123 = vmatpush1.msra.mxu0 0.0
        %1124 = vmatprep.subr.mxu0 0.0
        %1125 = vmatpush1.msra.mxu0 0.0
        %1126 = vmatprep.mubr.f32.mxu0 0.0
        %1127 = vmatmul.mubr.f32.gmra.mrb[0].mxu0 %v1038
        %v1128 = vpop.f32.mrb[0].mxu0
        %v1129 = vadd.f32 %v1060, %v1128
        %v1130 = vpop.f32.mrb[0].mxu0
        %1131 = vdwg.mxu0
        %v1132 = vld [vmem:[%s692] sm:$0xff]
        %v1133 = vld [vmem:[%s692 + $0x8] sm:$0xff]
        %v1134 = vld [vmem:[%s692 + $0x10] sm:$0xff]
        %v1135 = vld [vmem:[%s692 + $0x18] sm:$0xff]
        %v1136 = vld [vmem:[%s692 + $0x20] sm:$0xff]
        %v1137 = vld [vmem:[%s692 + $0x28] sm:$0xff]
        %v1138 = vld [vmem:[%s692 + $0x30] sm:$0xff]
        %v1139 = vld [vmem:[%s692 + $0x38] sm:$0xff]
        %v1140 = vld [vmem:[%s692 + $0x40] sm:$0xff]
        %v1141 = vld [vmem:[%s692 + $0x48] sm:$0xff]
        %v1142 = vld [vmem:[%s692 + $0x50] sm:$0xff]
        %v1143 = vld [vmem:[%s692 + $0x58] sm:$0xff]
        %v1144 = vld [vmem:[%s692 + $0x60] sm:$0xff]
        %v1145 = vld [vmem:[%s692 + $0x68] sm:$0xff]
        %v1146 = vld [vmem:[%s692 + $0x70] sm:$0xff]
        %v1147 = vld [vmem:[%s692 + $0x78] sm:$0xff]
        %v1148 = vld [vmem:[%s810] sm:$0x1]
        %v1150 = vlaneseq
        %v1151 = vshrl.u32 %v1150, 7
        %v1152 = vsub.s32 0, %v1151
        %v1153 = vrot.slane %v1148, %v1152
        %1155 = vmatprep.subr.mxu0 0.0
        %1156 = vmatpush1.msra.mxu0 %v1132
        %1157 = vmatprep.subr.mxu0 0.0
        %1158 = vmatpush1.msra.mxu0 %v1133
        %1159 = vmatprep.subr.mxu0 0.0
        %1160 = vmatpush1.msra.mxu0 %v1134
        %1161 = vmatprep.subr.mxu0 0.0
        %1162 = vmatpush1.msra.mxu0 %v1135
        %1163 = vmatprep.subr.mxu0 0.0
        %1164 = vmatpush1.msra.mxu0 %v1136
        %1165 = vmatprep.subr.mxu0 0.0
        %1166 = vmatpush1.msra.mxu0 %v1137
        %1167 = vmatprep.subr.mxu0 0.0
        %1168 = vmatpush1.msra.mxu0 %v1138
        %1169 = vmatprep.subr.mxu0 0.0
        %1170 = vmatpush1.msra.mxu0 %v1139
        %1171 = vmatprep.subr.mxu0 0.0
        %1172 = vmatpush1.msra.mxu0 %v1140
        %1173 = vmatprep.subr.mxu0 0.0
        %1174 = vmatpush1.msra.mxu0 %v1141
        %1175 = vmatprep.subr.mxu0 0.0
        %1176 = vmatpush1.msra.mxu0 %v1142
        %1177 = vmatprep.subr.mxu0 0.0
        %1178 = vmatpush1.msra.mxu0 %v1143
        %1179 = vmatprep.subr.mxu0 0.0
        %1180 = vmatpush1.msra.mxu0 %v1144
        %1181 = vmatprep.subr.mxu0 0.0
        %1182 = vmatpush1.msra.mxu0 %v1145
        %1183 = vmatprep.subr.mxu0 0.0
        %1184 = vmatpush1.msra.mxu0 %v1146
        %1185 = vmatprep.subr.mxu0 0.0
        %1186 = vmatpush1.msra.mxu0 %v1147
        %1187 = vmatprep.subr.mxu0 0.0
        %1188 = vmatpush1.msra.mxu0 0.0
        %1189 = vmatprep.subr.mxu0 0.0
        %1190 = vmatpush1.msra.mxu0 0.0
        %1191 = vmatprep.subr.mxu0 0.0
        %1192 = vmatpush1.msra.mxu0 0.0
        %1193 = vmatprep.subr.mxu0 0.0
        %1194 = vmatpush1.msra.mxu0 0.0
        %1195 = vmatprep.subr.mxu0 0.0
        %1196 = vmatpush1.msra.mxu0 0.0
        %1197 = vmatprep.subr.mxu0 0.0
        %1198 = vmatpush1.msra.mxu0 0.0
        %1199 = vmatprep.subr.mxu0 0.0
        %1200 = vmatpush1.msra.mxu0 0.0
        %1201 = vmatprep.subr.mxu0 0.0
        %1202 = vmatpush1.msra.mxu0 0.0
        %1203 = vmatprep.subr.mxu0 0.0
        %1204 = vmatpush1.msra.mxu0 0.0
        %1205 = vmatprep.subr.mxu0 0.0
        %1206 = vmatpush1.msra.mxu0 0.0
        %1207 = vmatprep.subr.mxu0 0.0
        %1208 = vmatpush1.msra.mxu0 0.0
        %1209 = vmatprep.subr.mxu0 0.0
        %1210 = vmatpush1.msra.mxu0 0.0
        %1211 = vmatprep.subr.mxu0 0.0
        %1212 = vmatpush1.msra.mxu0 0.0
        %1213 = vmatprep.subr.mxu0 0.0
        %1214 = vmatpush1.msra.mxu0 0.0
        %1215 = vmatprep.subr.mxu0 0.0
        %1216 = vmatpush1.msra.mxu0 0.0
        %1217 = vmatprep.subr.mxu0 0.0
        %1218 = vmatpush1.msra.mxu0 0.0
        %1219 = vmatprep.mubr.f32.mxu0 0.0
        %1220 = vmatmul.mubr.f32.gmra.mrb[0].mxu0 %v944
        %v1221 = vpop.f32.mrb[0].mxu0
        %v1222 = vadd.f32 %v1153, %v1221
        %v1223 = vpop.f32.mrb[0].mxu0
        %1224 = vdwg.mxu0
        %v1225 = vmax.f32 %v1222, 0.0
        %v1226 = vld [vmem:[%s701] sm:$0xff]
        %v1227 = vld [vmem:[%s701 + $0x8] sm:$0xff]
        %v1228 = vld [vmem:[%s701 + $0x10] sm:$0xff]
        %v1229 = vld [vmem:[%s701 + $0x18] sm:$0xff]
        %v1230 = vld [vmem:[%s701 + $0x20] sm:$0xff]
        %v1231 = vld [vmem:[%s701 + $0x28] sm:$0xff]
        %v1232 = vld [vmem:[%s701 + $0x30] sm:$0xff]
        %v1233 = vld [vmem:[%s701 + $0x38] sm:$0xff]
        %v1234 = vld [vmem:[%s701 + $0x40] sm:$0xff]
        %v1235 = vld [vmem:[%s701 + $0x48] sm:$0xff]
        %v1236 = vld [vmem:[%s701 + $0x50] sm:$0xff]
        %v1237 = vld [vmem:[%s701 + $0x58] sm:$0xff]
        %v1238 = vld [vmem:[%s701 + $0x60] sm:$0xff]
        %v1239 = vld [vmem:[%s701 + $0x68] sm:$0xff]
        %v1240 = vld [vmem:[%s701 + $0x70] sm:$0xff]
        %v1241 = vld [vmem:[%s701 + $0x78] sm:$0xff]
        %v1242 = vld [vmem:[%s816] sm:$0x1]
        %v1244 = vlaneseq
        %v1245 = vshrl.u32 %v1244, 7
        %v1246 = vsub.s32 0, %v1245
        %v1247 = vrot.slane %v1242, %v1246
        %1249 = vmatprep.subr.mxu0 0.0
        %1250 = vmatpush1.msra.mxu0 %v1226
        %1251 = vmatprep.subr.mxu0 0.0
        %1252 = vmatpush1.msra.mxu0 %v1227
        %1253 = vmatprep.subr.mxu0 0.0
        %1254 = vmatpush1.msra.mxu0 %v1228
        %1255 = vmatprep.subr.mxu0 0.0
        %1256 = vmatpush1.msra.mxu0 %v1229
        %1257 = vmatprep.subr.mxu0 0.0
        %1258 = vmatpush1.msra.mxu0 %v1230
        %1259 = vmatprep.subr.mxu0 0.0
        %1260 = vmatpush1.msra.mxu0 %v1231
        %1261 = vmatprep.subr.mxu0 0.0
        %1262 = vmatpush1.msra.mxu0 %v1232
        %1263 = vmatprep.subr.mxu0 0.0
        %1264 = vmatpush1.msra.mxu0 %v1233
        %1265 = vmatprep.subr.mxu0 0.0
        %1266 = vmatpush1.msra.mxu0 %v1234
        %1267 = vmatprep.subr.mxu0 0.0
        %1268 = vmatpush1.msra.mxu0 %v1235
        %1269 = vmatprep.subr.mxu0 0.0
        %1270 = vmatpush1.msra.mxu0 %v1236
        %1271 = vmatprep.subr.mxu0 0.0
        %1272 = vmatpush1.msra.mxu0 %v1237
        %1273 = vmatprep.subr.mxu0 0.0
        %1274 = vmatpush1.msra.mxu0 %v1238
        %1275 = vmatprep.subr.mxu0 0.0
        %1276 = vmatpush1.msra.mxu0 %v1239
        %1277 = vmatprep.subr.mxu0 0.0
        %1278 = vmatpush1.msra.mxu0 %v1240
        %1279 = vmatprep.subr.mxu0 0.0
        %1280 = vmatpush1.msra.mxu0 %v1241
        %1281 = vmatprep.subr.mxu0 0.0
        %1282 = vmatpush1.msra.mxu0 0.0
        %1283 = vmatprep.subr.mxu0 0.0
        %1284 = vmatpush1.msra.mxu0 0.0
        %1285 = vmatprep.subr.mxu0 0.0
        %1286 = vmatpush1.msra.mxu0 0.0
        %1287 = vmatprep.subr.mxu0 0.0
        %1288 = vmatpush1.msra.mxu0 0.0
        %1289 = vmatprep.subr.mxu0 0.0
        %1290 = vmatpush1.msra.mxu0 0.0
        %1291 = vmatprep.subr.mxu0 0.0
        %1292 = vmatpush1.msra.mxu0 0.0
        %1293 = vmatprep.subr.mxu0 0.0
        %1294 = vmatpush1.msra.mxu0 0.0
        %1295 = vmatprep.subr.mxu0 0.0
        %1296 = vmatpush1.msra.mxu0 0.0
        %1297 = vmatprep.subr.mxu0 0.0
        %1298 = vmatpush1.msra.mxu0 0.0
        %1299 = vmatprep.subr.mxu0 0.0
        %1300 = vmatpush1.msra.mxu0 0.0
        %1301 = vmatprep.subr.mxu0 0.0
        %1302 = vmatpush1.msra.mxu0 0.0
        %1303 = vmatprep.subr.mxu0 0.0
        %1304 = vmatpush1.msra.mxu0 0.0
        %1305 = vmatprep.subr.mxu0 0.0
        %1306 = vmatpush1.msra.mxu0 0.0
        %1307 = vmatprep.subr.mxu0 0.0
        %1308 = vmatpush1.msra.mxu0 0.0
        %1309 = vmatprep.subr.mxu0 0.0
        %1310 = vmatpush1.msra.mxu0 0.0
        %1311 = vmatprep.subr.mxu0 0.0
        %1312 = vmatpush1.msra.mxu0 0.0
        %1313 = vmatprep.mubr.f32.mxu0 0.0
        %1314 = vmatmul.mubr.f32.gmra.mrb[0].mxu0 %v1129
        %v1315 = vpop.f32.mrb[0].mxu0
        %v1316 = vadd.f32 %v1247, %v1315
        %v1317 = vpop.f32.mrb[0].mxu0
        %1318 = vdwg.mxu0
        %v1319 = vmax.f32 %v1316, 0.0
        %v1320 = vld [vmem:[%s821] sm:$0x1]
        %v1322 = vlaneseq
        %v1323 = vshrl.u32 %v1322, 7
        %v1324 = vsub.s32 0, %v1323
        %v1325 = vrot.slane %v1320, %v1324
        %v1327 = vmul.f32 %v1225, %v1325
        %1328 = vadd.xlane.f32.xlu0 %v1327
        %v1329 = vpop.xlane.xlu0 %1328
        %v1330 = vld [vmem:[%s826] sm:$0x1]
        %v1332 = vlaneseq
        %v1333 = vshrl.u32 %v1332, 7
        %v1334 = vsub.s32 0, %v1333
        %v1335 = vrot.slane %v1330, %v1334
        %v1337 = vmul.f32 %v1319, %v1335
        %1338 = vadd.xlane.f32.xlu0 %v1337
        %v1339 = vpop.xlane.xlu0 %1338
        %v1340 = vadd.f32 %v1329, %v1339
        %v1341 = vld [vmem:[%s831] sm:$0x1]
        %v1343 = vlaneseq
        %v1344 = vshrl.u32 %v1343, 7
        %v1345 = vsub.s32 0, %v1344
        %v1346 = vrot.slane %v1341, %v1345
        %v1348 = vadd.f32 %v1340, %v1346
        %v1349 = vxor.u32 %v1348, 2147483648
        %v1350 = vmul.f32 %v1349, 1.442695
        %v1351 = vpow.pop %v1350
        %v1352 = vadd.f32 %v1351, 1.0
        %v1353 = vrcp.pop %v1352
        %v1354 = vmul.f32 1.0, %v1353
        %1356 = vset.pattern.permute.xlu0 0
        %1357 = vperm.xlu0 %1356, %v1354
        %v1358 = vpop.permute.xlu0 %1357
        %v1360 = vmul.f32 %v1358, %v1129
        %v1361 = vsub.f32 1.0, %v1354
        %1363 = vset.pattern.permute.xlu0 0
        %1364 = vperm.xlu0 %1363, %v1361
        %v1365 = vpop.permute.xlu0 %1364
        %v1367 = vmul.f32 %v1365, %v944
        %v1368 = vadd.f32 %v1360, %v1367
        %1369 = vst [vmem:[%s793] sm:$0xff] %v1368
        %s1370 = sand.u32 %s427, 1
        %s1371 = scalar_lea.sflag [#allocation6], %s1370
        %s1372 = sand.u32 %s427, 1
        %s1373 = smul.addr %s1372, 8
        %s1374 = scalar_lea.vmem [#allocation16], %s1373
        // Predicated region
        $region105: #{tpu_custom_call.1} parent=75 // pred_check
          %p1375 = pneg %p437
        $region106: #{tpu_custom_call.1} parent=75 // pred_check_branch
          %1377 = sbr.rel (%p1375) target = $region108
        $region107: #{tpu_custom_call.1} parent=75 // pred_region
          %s1379 = ssub.s32 128, 128
          %1380 = vsyncadd %s1371, %s1379
          %s1381 = smul.addr %s43, 128
          %s1382 = scalar_lea.hbm %s15, %s1381
          %s1384 = sshll.u32 %s1374, 4
          %s1385 = int_to_ptr.vmem [resolvable:$true] %s1384
          %1387 = dma.vmem_to_hbm [thread:$0]  %s1385, 128, %s1382, %s1371
        $region108: #{tpu_custom_call.1} parent=75 // pred_fallthru
          _
      $region76: #{tpu_custom_call.1} parent=5 // pred_fallthru
        _
      %p1388 = scmp.le.s32.totalorder 2, %s38
      // Predicated region
      $region109: #{tpu_custom_call.1} parent=5 // pred_check
        %p1389 = pneg %p1388
      $region110: #{tpu_custom_call.1} parent=5 // pred_check_branch
        %1391 = sbr.rel (%p1389) target = $region112
      $region111: #{tpu_custom_call.1} parent=5 // pred_region
        %s1392 = ssub.s32 %s38, 2
        // Predicated region
        $region113: #{tpu_custom_call.1} parent=111 // pred_check
          %p1393 = pneg %p443
        $region114: #{tpu_custom_call.1} parent=111 // pred_check_branch
          %1395 = sbr.rel (%p1393) target = $region116
        $region115: #{tpu_custom_call.1} parent=111 // pred_region
          %s1396 = sand.u32 %s428, 1
          %s1397 = scalar_lea.sflag [#allocation6], %s1396
          %s1398 = sand.u32 %s428, 1
          %s1399 = smul.addr %s1398, 8
          %s1400 = scalar_lea.vmem [#allocation16], %s1399
          %1401 = dma.done %s1397, 128
        $region116: #{tpu_custom_call.1} parent=111 // pred_fallthru
          _
      $region112: #{tpu_custom_call.1} parent=5 // pred_fallthru
        _
    $region6: #{tpu_custom_call.1} parent=1 // loop_footer
      %s42 = sadd.s32 1, %s38
    $region7: #{tpu_custom_call.1} parent=1 // loop_footer_branch
      %37 = sbr.rel target = $region3
    $region8: #{tpu_custom_call.1} parent=1 // loop_exit
      _
    %1402 = vsyncpa [#allocation5], 1
    %s1403 = scalar_lea.sflag [#allocation5], 1
    %1404 = vsyncpa %s1403, 1
    %1405 = vsyncpa [#allocation8], 1
    %1406 = vsyncpa [#allocation11], 1
    %s1407 = scalar_lea.sflag [#allocation11], 1
    %1408 = vsyncpa %s1407, 1
    %1409 = vsyncpa [#allocation14], 1
    %s1410 = scalar_lea.sflag [#allocation14], 1
    %1411 = vsyncpa %s1410, 1
    %1412 = vsyncpa [#allocation6], 1
    %s1413 = scalar_lea.sflag [#allocation6], 1
    %1414 = vsyncpa %s1413, 1

</llo_original>
